<compile_context>
chip_gen: v5e
topology: v5e:2x2
jax: 0.10.0
libtpu: 0.0.40
codegen_flags: <defaults>
</compile_context>

<pallas_src>
import functools

import jax
import jax.numpy as jnp
from jax import lax
from jax.experimental import pallas as pl
from jax.experimental.pallas import tpu as pltpu

# ----------------------------- config ---------------------------------------
HIDDEN = 32          # config.attention_emb
N_HEADS = 4          # config.n_heads
HEAD_DIM = HIDDEN // N_HEADS
BATCH = 2
SEQ_Q = 8
SEQ_KV = 8
SCALE = float(HEAD_DIM) ** 0.5   # torch.sqrt(FloatTensor([head_dim]))


# ----------------------------- kernel ---------------------------------------
def cross_attention_kernel(q_ref, k_ref, v_ref,
                           wq_ref, bq_ref, wk_ref, bk_ref,
                           wv_ref, bv_ref, wo_ref, bo_ref,
                           o_ref, *, batch, seq_q, seq_kv, n_heads):
    """Single invocation handles the whole problem (it is overhead-bound).

    q_ref: (B*Sq, H); k_ref/v_ref: (B*Skv, H)  — batch folded into rows.
    wq/wk/wv_ref: (n_heads, H, hd) per-head input-projection blocks in
                  (in, out) layout; the Q block is pre-scaled by 1/sqrt(hd).
    bq/bk/bv_ref: (n_heads, 1, hd) matching bias blocks (bq pre-scaled).
    wo_ref:       (n_heads, hd, H) per-head row blocks of the output proj.
    bo_ref:       (1, H).
    o_ref:        (B*Sq, H).
    """
    q = q_ref[...]   # (B*Sq, H)
    k = k_ref[...]   # (B*Skv, H)
    v = v_ref[...]   # (B*Skv, H)

    # Contract the last axes (== A @ B.T) without an explicit transpose.
    dn_qkT = (((1,), (1,)), ((), ()))

    # Per-batch register accumulators for the output projection.
    out_rows = [None] * batch

    # Static unroll over heads; every weight access is a clean leading-axis
    # index of a VMEM ref (no in-register lane extracts).
    for h in range(n_heads):
        # Per-head projections straight off the MXU (Q block pre-scaled).
        Qh = jnp.dot(q, wq_ref[h], preferred_element_type=jnp.float32) + bq_ref[h]
        Kh = jnp.dot(k, wk_ref[h], preferred_element_type=jnp.float32) + bk_ref[h]
        Vh = jnp.dot(v, wv_ref[h], preferred_element_type=jnp.float32) + bv_ref[h]

        for b in range(batch):
            # vreg-aligned (sublane) row slices: one batch element each.
            Qb = Qh[b * seq_q:(b + 1) * seq_q, :]      # (Sq, hd)
            Kb = Kh[b * seq_kv:(b + 1) * seq_kv, :]    # (Skv, hd)
            Vb = Vh[b * seq_kv:(b + 1) * seq_kv, :]    # (Skv, hd)

            scores = lax.dot_general(Qb, Kb, dn_qkT,
                                     preferred_element_type=jnp.float32)
            # Numerically-stable softmax over keys (== torch.softmax dim=-1),
            # with exact normalization for tight parity with the reference.
            scores = scores - jnp.max(scores, axis=-1, keepdims=True)
            p = jnp.exp(scores)
            alpha = p / jnp.sum(p, axis=-1, keepdims=True)
            # TODO(synk): dropout on `alpha` omitted (module evaluated in eval mode).
            ctx = jnp.dot(alpha, Vb, preferred_element_type=jnp.float32)  # (Sq, hd)

            # Accumulate this head's contribution to the output projection in
            # registers: ctx @ Wo[h*hd:(h+1)*hd, :] (row block of Wo).
            contrib = jnp.dot(ctx, wo_ref[h], preferred_element_type=jnp.float32)
            out_rows[b] = contrib if out_rows[b] is None else out_rows[b] + contrib

    bo = bo_ref[...]   # (1, H)
    for b in range(batch):
        o_ref[b * seq_q:(b + 1) * seq_q, :] = (out_rows[b] + bo).astype(o_ref.dtype)


# ----------------------------- wrapper ---------------------------------------
@jax.jit
def cross_attention(query, key, value, params):
    B, Sq, H = query.shape
    _, Skv, _ = key.shape
    wq, bq, wk, bk, wv, bv, wo, bo = params

    # One-time layout plumbing OUTSIDE the kernel:
    #   * transpose (out, in) -> (in, out) so the kernel never calls .T,
    #   * fold 1/sqrt(head_dim) into the Q projection weight+bias,
    #   * split every projection into per-head blocks so the kernel indexes
    #     heads along a leading axis (no lane slicing in registers).
    inv_scale = jnp.float32(1.0 / SCALE)

    def split_in_proj(w, b, scale=None):
        w_t = w.T if scale is None else w.T * scale            # (in, out)
        b_s = b if scale is None else b * scale                # (1, out)
        w_h = w_t.reshape(H, N_HEADS, HEAD_DIM).transpose(1, 0, 2)   # (nh, in, hd)
        b_h = b_s.reshape(1, N_HEADS, HEAD_DIM).transpose(1, 0, 2)   # (nh, 1, hd)
        return w_h, b_h

    wq_h, bq_h = split_in_proj(wq, bq, inv_scale)   # scale folded into Q proj
    wk_h, bk_h = split_in_proj(wk, bk)
    wv_h, bv_h = split_in_proj(wv, bv)
    wo_h = wo.T.reshape(N_HEADS, HEAD_DIM, H)       # per-head row blocks of Wo

    # Fold batch into rows; undone (for free, same row-major layout) at the end.
    q2 = query.reshape(B * Sq, H)
    k2 = key.reshape(B * Skv, H)
    v2 = value.reshape(B * Skv, H)

    kernel = functools.partial(cross_attention_kernel,
                               batch=B, seq_q=Sq, seq_kv=Skv, n_heads=N_HEADS)

    full2 = lambda shape: pl.BlockSpec(shape, lambda i: (0, 0))
    full3 = lambda shape: pl.BlockSpec(shape, lambda i: (0, 0, 0))

    out = pl.pallas_call(
        kernel,
        out_shape=jax.ShapeDtypeStruct((B * Sq, H), query.dtype),
        grid=(1,),    # single step: the problem is overhead-bound, not compute-bound
        in_specs=[
            full2((B * Sq, H)),                                             # query
            full2((B * Skv, H)),                                            # key
            full2((B * Skv, H)),                                            # value
            full3((N_HEADS, H, HEAD_DIM)), full3((N_HEADS, 1, HEAD_DIM)),   # fc_q
            full3((N_HEADS, H, HEAD_DIM)), full3((N_HEADS, 1, HEAD_DIM)),   # fc_k
            full3((N_HEADS, H, HEAD_DIM)), full3((N_HEADS, 1, HEAD_DIM)),   # fc_v
            full3((N_HEADS, HEAD_DIM, H)), full2((1, H)),                   # fc (out)
        ],
        out_specs=full2((B * Sq, H)),
        compiler_params=pltpu.CompilerParams(
            dimension_semantics=("arbitrary",)),
    )(q2, k2, v2, wq_h, bq_h, wk_h, bk_h, wv_h, bv_h, wo_h, bo)

    return out.reshape(B, Sq, H)


# ----------------------------- reference -------------------------------------
def cross_attention_ref(query, key, value, params):
    """Pure-JAX reference reproducing the PyTorch forward (attn_mask=None)."""
    wq, bq, wk, bk, wv, bv, wo, bo = params
    B, Sq, H = query.shape

    def lin(x, w, b):
        return jnp.einsum("bsh,oh->bso", x, w) + b[0]

    Q = lin(query, wq, bq).reshape(B, Sq, N_HEADS, HEAD_DIM).transpose(0, 2, 1, 3)
    K = lin(key, wk, bk).reshape(B, -1, N_HEADS, HEAD_DIM).transpose(0, 2, 1, 3)
    V = lin(value, wv, bv).reshape(B, -1, N_HEADS, HEAD_DIM).transpose(0, 2, 1, 3)

    alpha = jnp.einsum("bhqd,bhkd->bhqk", Q, K) / SCALE
    alpha = jax.nn.softmax(alpha, axis=-1)
    x = jnp.einsum("bhqk,bhkd->bhqd", alpha, V)
    x = x.transpose(0, 2, 1, 3).reshape(B, Sq, H)
    return jnp.einsum("bsh,oh->bso", x, wo) + bo[0]


# ----------------------------- main -------------------------------------------
def _init_linear(key, out_dim, in_dim):
    # PyTorch-default-like uniform(-1/sqrt(fan_in), 1/sqrt(fan_in)); deterministic.
    kw, kb = jax.random.split(key)
    bound = 1.0 / (in_dim ** 0.5)
    w = jax.random.uniform(kw, (out_dim, in_dim), jnp.float32, -bound, bound)
    b = jax.random.uniform(kb, (1, out_dim), jnp.float32, -bound, bound)
    return w, b


if __name__ == "__main__":
    root = jax.random.PRNGKey(0)
    keys = jax.random.split(root, 8)

    wq, bq = _init_linear(keys[0], HIDDEN, HIDDEN)
    wk, bk = _init_linear(keys[1], HIDDEN, HIDDEN)
    wv, bv = _init_linear(keys[2], HIDDEN, HIDDEN)
    wo, bo = _init_linear(keys[3], HIDDEN, HIDDEN)
    params = (wq, bq, wk, bk, wv, bv, wo, bo)

    query = jax.random.normal(keys[4], (BATCH, SEQ_Q, HIDDEN), jnp.float32)
    key_in = jax.random.normal(keys[5], (BATCH, SEQ_KV, HIDDEN), jnp.float32)
    value = jax.random.normal(keys[6], (BATCH, SEQ_KV, HIDDEN), jnp.float32)

    out = cross_attention(query, key_in, value, params)
    out = jax.block_until_ready(out)

    ref = cross_attention_ref(query, key_in, value, params)
    assert out.shape == (BATCH, SEQ_Q, HIDDEN)
    # Exact softmax normalization in-kernel -> tight tolerance again.
    assert jnp.allclose(out, ref, atol=5e-4, rtol=5e-4), (
        "mismatch vs reference: max abs err = "
        f"{float(jnp.max(jnp.abs(out - ref)))}")

    print("KERNEL_OK")
</pallas_src>

<mosaic_0001>
module attributes {stable_mosaic.version = 11 : i64} {
  func.func @cross_attention_kernel(%arg0: i32, %arg1: memref<16x32xf32, #tpu.memory_space<vmem>>, %arg2: memref<16x32xf32, #tpu.memory_space<vmem>>, %arg3: memref<16x32xf32, #tpu.memory_space<vmem>>, %arg4: memref<4x32x8xf32, #tpu.memory_space<vmem>>, %arg5: memref<4x1x8xf32, #tpu.memory_space<vmem>>, %arg6: memref<4x32x8xf32, #tpu.memory_space<vmem>>, %arg7: memref<4x1x8xf32, #tpu.memory_space<vmem>>, %arg8: memref<4x32x8xf32, #tpu.memory_space<vmem>>, %arg9: memref<4x1x8xf32, #tpu.memory_space<vmem>>, %arg10: memref<4x8x32xf32, #tpu.memory_space<vmem>>, %arg11: memref<1x32xf32, #tpu.memory_space<vmem>>, %arg12: memref<16x32xf32, #tpu.memory_space<vmem>>) attributes {dimension_semantics = [#tpu.dimension_semantics<arbitrary>], iteration_bounds = array<i64: 1>, scalar_prefetch = 0 : i64, scratch_operands = 0 : i64, tpu.core_type = #tpu.core_type<tc>, window_params = [{pipeline_mode = #tpu.pipeline_mode<synchronous>, transform_indices = @transform_0, window_bounds = array<i64: 16, 32>}, {pipeline_mode = #tpu.pipeline_mode<synchronous>, transform_indices = @transform_1, window_bounds = array<i64: 16, 32>}, {pipeline_mode = #tpu.pipeline_mode<synchronous>, transform_indices = @transform_2, window_bounds = array<i64: 16, 32>}, {pipeline_mode = #tpu.pipeline_mode<synchronous>, transform_indices = @transform_3, window_bounds = array<i64: 4, 32, 8>}, {pipeline_mode = #tpu.pipeline_mode<synchronous>, transform_indices = @transform_4, window_bounds = array<i64: 4, 1, 8>}, {pipeline_mode = #tpu.pipeline_mode<synchronous>, transform_indices = @transform_5, window_bounds = array<i64: 4, 32, 8>}, {pipeline_mode = #tpu.pipeline_mode<synchronous>, transform_indices = @transform_6, window_bounds = array<i64: 4, 1, 8>}, {pipeline_mode = #tpu.pipeline_mode<synchronous>, transform_indices = @transform_7, window_bounds = array<i64: 4, 32, 8>}, {pipeline_mode = #tpu.pipeline_mode<synchronous>, transform_indices = @transform_8, window_bounds = array<i64: 4, 1, 8>}, {pipeline_mode = #tpu.pipeline_mode<synchronous>, transform_indices = @transform_9, window_bounds = array<i64: 4, 8, 32>}, {pipeline_mode = #tpu.pipeline_mode<synchronous>, transform_indices = @transform_10, window_bounds = array<i64: 1, 32>}, {pipeline_mode = #tpu.pipeline_mode<synchronous>, transform_indices = @transform_11, window_bounds = array<i64: 16, 32>}]} {
    %c0 = arith.constant 0 : index
    %c0_0 = arith.constant 0 : index
    %0 = vector.load %arg1[%c0, %c0_0] : memref<16x32xf32, #tpu.memory_space<vmem>>, vector<16x32xf32>
    %c0_1 = arith.constant 0 : index
    %c0_2 = arith.constant 0 : index
    %1 = vector.load %arg2[%c0_1, %c0_2] : memref<16x32xf32, #tpu.memory_space<vmem>>, vector<16x32xf32>
    %c0_3 = arith.constant 0 : index
    %c0_4 = arith.constant 0 : index
    %2 = vector.load %arg3[%c0_3, %c0_4] : memref<16x32xf32, #tpu.memory_space<vmem>>, vector<16x32xf32>
    %c0_5 = arith.constant 0 : index
    %c0_6 = arith.constant 0 : index
    %c0_7 = arith.constant 0 : index
    %3 = vector.load %arg4[%c0_5, %c0_6, %c0_7] : memref<4x32x8xf32, #tpu.memory_space<vmem>>, vector<1x32x8xf32>
    %4 = vector.shape_cast %3 : vector<1x32x8xf32> to vector<32x8xf32>
    %cst = arith.constant dense<0.000000e+00> : vector<16x8xf32>
    %5 = tpu.matmul %0, %4, %cst {dimension_numbers = #tpu.dot_dimension_numbers<[1], [0], [0], [1], [0, 0, 1, 1], [], []>} : vector<16x32xf32>, vector<32x8xf32>, vector<16x8xf32> -> vector<16x8xf32>
    %c0_8 = arith.constant 0 : index
    %c0_9 = arith.constant 0 : index
    %c0_10 = arith.constant 0 : index
    %6 = vector.load %arg5[%c0_8, %c0_9, %c0_10] : memref<4x1x8xf32, #tpu.memory_space<vmem>>, vector<1x1x8xf32>
    %7 = vector.shape_cast %6 : vector<1x1x8xf32> to vector<1x8xf32>
    %8 = vector.broadcast %7 : vector<1x8xf32> to vector<16x8xf32>
    %9 = arith.addf %5, %8 : vector<16x8xf32>
    %c0_11 = arith.constant 0 : index
    %c0_12 = arith.constant 0 : index
    %c0_13 = arith.constant 0 : index
    %10 = vector.load %arg6[%c0_11, %c0_12, %c0_13] : memref<4x32x8xf32, #tpu.memory_space<vmem>>, vector<1x32x8xf32>
    %11 = vector.shape_cast %10 : vector<1x32x8xf32> to vector<32x8xf32>
    %cst_14 = arith.constant dense<0.000000e+00> : vector<16x8xf32>
    %12 = tpu.matmul %1, %11, %cst_14 {dimension_numbers = #tpu.dot_dimension_numbers<[1], [0], [0], [1], [0, 0, 1, 1], [], []>} : vector<16x32xf32>, vector<32x8xf32>, vector<16x8xf32> -> vector<16x8xf32>
    %c0_15 = arith.constant 0 : index
    %c0_16 = arith.constant 0 : index
    %c0_17 = arith.constant 0 : index
    %13 = vector.load %arg7[%c0_15, %c0_16, %c0_17] : memref<4x1x8xf32, #tpu.memory_space<vmem>>, vector<1x1x8xf32>
    %14 = vector.shape_cast %13 : vector<1x1x8xf32> to vector<1x8xf32>
    %15 = vector.broadcast %14 : vector<1x8xf32> to vector<16x8xf32>
    %16 = arith.addf %12, %15 : vector<16x8xf32>
    %c0_18 = arith.constant 0 : index
    %c0_19 = arith.constant 0 : index
    %c0_20 = arith.constant 0 : index
    %17 = vector.load %arg8[%c0_18, %c0_19, %c0_20] : memref<4x32x8xf32, #tpu.memory_space<vmem>>, vector<1x32x8xf32>
    %18 = vector.shape_cast %17 : vector<1x32x8xf32> to vector<32x8xf32>
    %cst_21 = arith.constant dense<0.000000e+00> : vector<16x8xf32>
    %19 = tpu.matmul %2, %18, %cst_21 {dimension_numbers = #tpu.dot_dimension_numbers<[1], [0], [0], [1], [0, 0, 1, 1], [], []>} : vector<16x32xf32>, vector<32x8xf32>, vector<16x8xf32> -> vector<16x8xf32>
    %c0_22 = arith.constant 0 : index
    %c0_23 = arith.constant 0 : index
    %c0_24 = arith.constant 0 : index
    %20 = vector.load %arg9[%c0_22, %c0_23, %c0_24] : memref<4x1x8xf32, #tpu.memory_space<vmem>>, vector<1x1x8xf32>
    %21 = vector.shape_cast %20 : vector<1x1x8xf32> to vector<1x8xf32>
    %22 = vector.broadcast %21 : vector<1x8xf32> to vector<16x8xf32>
    %23 = arith.addf %19, %22 : vector<16x8xf32>
    %24 = vector.extract_strided_slice %9 {offsets = [0, 0], sizes = [8, 8], strides = [1, 1]} : vector<16x8xf32> to vector<8x8xf32>
    %25 = vector.extract_strided_slice %16 {offsets = [0, 0], sizes = [8, 8], strides = [1, 1]} : vector<16x8xf32> to vector<8x8xf32>
    %26 = vector.extract_strided_slice %23 {offsets = [0, 0], sizes = [8, 8], strides = [1, 1]} : vector<16x8xf32> to vector<8x8xf32>
    %cst_25 = arith.constant dense<0.000000e+00> : vector<8x8xf32>
    %27 = tpu.matmul %24, %25, %cst_25 {dimension_numbers = #tpu.dot_dimension_numbers<[1], [1], [0], [0], [0, 0, 1, 0], [], []>} : vector<8x8xf32>, vector<8x8xf32>, vector<8x8xf32> -> vector<8x8xf32>
    %cst_26 = arith.constant dense<0xFF800000> : vector<8xf32>
    %28 = vector.multi_reduction <maximumf>, %27, %cst_26 [1] : vector<8x8xf32> to vector<8xf32>
    %29 = vector.shape_cast %28 : vector<8xf32> to vector<8x1xf32>
    %30 = vector.broadcast %29 : vector<8x1xf32> to vector<8x8xf32>
    %31 = arith.subf %27, %30 : vector<8x8xf32>
    %32 = math.exp %31 : vector<8x8xf32>
    %cst_27 = arith.constant dense<0.000000e+00> : vector<8xf32>
    %33 = vector.multi_reduction <add>, %32, %cst_27 [1] : vector<8x8xf32> to vector<8xf32>
    %34 = vector.shape_cast %33 : vector<8xf32> to vector<8x1xf32>
    %35 = vector.broadcast %34 : vector<8x1xf32> to vector<8x8xf32>
    %36 = arith.divf %32, %35 : vector<8x8xf32>
    %cst_28 = arith.constant dense<0.000000e+00> : vector<8x8xf32>
    %37 = tpu.matmul %36, %26, %cst_28 {dimension_numbers = #tpu.dot_dimension_numbers<[1], [0], [0], [1], [0, 0, 1, 1], [], []>} : vector<8x8xf32>, vector<8x8xf32>, vector<8x8xf32> -> vector<8x8xf32>
    %c0_29 = arith.constant 0 : index
    %c0_30 = arith.constant 0 : index
    %c0_31 = arith.constant 0 : index
    %38 = vector.load %arg10[%c0_29, %c0_30, %c0_31] : memref<4x8x32xf32, #tpu.memory_space<vmem>>, vector<1x8x32xf32>
    %39 = vector.shape_cast %38 : vector<1x8x32xf32> to vector<8x32xf32>
    %cst_32 = arith.constant dense<0.000000e+00> : vector<8x32xf32>
    %40 = tpu.matmul %37, %39, %cst_32 {dimension_numbers = #tpu.dot_dimension_numbers<[1], [0], [0], [1], [0, 0, 1, 1], [], []>} : vector<8x8xf32>, vector<8x32xf32>, vector<8x32xf32> -> vector<8x32xf32>
    %41 = vector.extract_strided_slice %9 {offsets = [8, 0], sizes = [8, 8], strides = [1, 1]} : vector<16x8xf32> to vector<8x8xf32>
    %42 = vector.extract_strided_slice %16 {offsets = [8, 0], sizes = [8, 8], strides = [1, 1]} : vector<16x8xf32> to vector<8x8xf32>
    %43 = vector.extract_strided_slice %23 {offsets = [8, 0], sizes = [8, 8], strides = [1, 1]} : vector<16x8xf32> to vector<8x8xf32>
    %cst_33 = arith.constant dense<0.000000e+00> : vector<8x8xf32>
    %44 = tpu.matmul %41, %42, %cst_33 {dimension_numbers = #tpu.dot_dimension_numbers<[1], [1], [0], [0], [0, 0, 1, 0], [], []>} : vector<8x8xf32>, vector<8x8xf32>, vector<8x8xf32> -> vector<8x8xf32>
    %cst_34 = arith.constant dense<0xFF800000> : vector<8xf32>
    %45 = vector.multi_reduction <maximumf>, %44, %cst_34 [1] : vector<8x8xf32> to vector<8xf32>
    %46 = vector.shape_cast %45 : vector<8xf32> to vector<8x1xf32>
    %47 = vector.broadcast %46 : vector<8x1xf32> to vector<8x8xf32>
    %48 = arith.subf %44, %47 : vector<8x8xf32>
    %49 = math.exp %48 : vector<8x8xf32>
    %cst_35 = arith.constant dense<0.000000e+00> : vector<8xf32>
    %50 = vector.multi_reduction <add>, %49, %cst_35 [1] : vector<8x8xf32> to vector<8xf32>
    %51 = vector.shape_cast %50 : vector<8xf32> to vector<8x1xf32>
    %52 = vector.broadcast %51 : vector<8x1xf32> to vector<8x8xf32>
    %53 = arith.divf %49, %52 : vector<8x8xf32>
    %cst_36 = arith.constant dense<0.000000e+00> : vector<8x8xf32>
    %54 = tpu.matmul %53, %43, %cst_36 {dimension_numbers = #tpu.dot_dimension_numbers<[1], [0], [0], [1], [0, 0, 1, 1], [], []>} : vector<8x8xf32>, vector<8x8xf32>, vector<8x8xf32> -> vector<8x8xf32>
    %c0_37 = arith.constant 0 : index
    %c0_38 = arith.constant 0 : index
    %c0_39 = arith.constant 0 : index
    %55 = vector.load %arg10[%c0_37, %c0_38, %c0_39] : memref<4x8x32xf32, #tpu.memory_space<vmem>>, vector<1x8x32xf32>
    %56 = vector.shape_cast %55 : vector<1x8x32xf32> to vector<8x32xf32>
    %cst_40 = arith.constant dense<0.000000e+00> : vector<8x32xf32>
    %57 = tpu.matmul %54, %56, %cst_40 {dimension_numbers = #tpu.dot_dimension_numbers<[1], [0], [0], [1], [0, 0, 1, 1], [], []>} : vector<8x8xf32>, vector<8x32xf32>, vector<8x32xf32> -> vector<8x32xf32>
    %c1 = arith.constant 1 : index
    %c0_41 = arith.constant 0 : index
    %c0_42 = arith.constant 0 : index
    %58 = vector.load %arg4[%c1, %c0_41, %c0_42] : memref<4x32x8xf32, #tpu.memory_space<vmem>>, vector<1x32x8xf32>
    %59 = vector.shape_cast %58 : vector<1x32x8xf32> to vector<32x8xf32>
    %cst_43 = arith.constant dense<0.000000e+00> : vector<16x8xf32>
    %60 = tpu.matmul %0, %59, %cst_43 {dimension_numbers = #tpu.dot_dimension_numbers<[1], [0], [0], [1], [0, 0, 1, 1], [], []>} : vector<16x32xf32>, vector<32x8xf32>, vector<16x8xf32> -> vector<16x8xf32>
    %c1_44 = arith.constant 1 : index
    %c0_45 = arith.constant 0 : index
    %c0_46 = arith.constant 0 : index
    %61 = vector.load %arg5[%c1_44, %c0_45, %c0_46] : memref<4x1x8xf32, #tpu.memory_space<vmem>>, vector<1x1x8xf32>
    %62 = vector.shape_cast %61 : vector<1x1x8xf32> to vector<1x8xf32>
    %63 = vector.broadcast %62 : vector<1x8xf32> to vector<16x8xf32>
    %64 = arith.addf %60, %63 : vector<16x8xf32>
    %c1_47 = arith.constant 1 : index
    %c0_48 = arith.constant 0 : index
    %c0_49 = arith.constant 0 : index
    %65 = vector.load %arg6[%c1_47, %c0_48, %c0_49] : memref<4x32x8xf32, #tpu.memory_space<vmem>>, vector<1x32x8xf32>
    %66 = vector.shape_cast %65 : vector<1x32x8xf32> to vector<32x8xf32>
    %cst_50 = arith.constant dense<0.000000e+00> : vector<16x8xf32>
    %67 = tpu.matmul %1, %66, %cst_50 {dimension_numbers = #tpu.dot_dimension_numbers<[1], [0], [0], [1], [0, 0, 1, 1], [], []>} : vector<16x32xf32>, vector<32x8xf32>, vector<16x8xf32> -> vector<16x8xf32>
    %c1_51 = arith.constant 1 : index
    %c0_52 = arith.constant 0 : index
    %c0_53 = arith.constant 0 : index
    %68 = vector.load %arg7[%c1_51, %c0_52, %c0_53] : memref<4x1x8xf32, #tpu.memory_space<vmem>>, vector<1x1x8xf32>
    %69 = vector.shape_cast %68 : vector<1x1x8xf32> to vector<1x8xf32>
    %70 = vector.broadcast %69 : vector<1x8xf32> to vector<16x8xf32>
    %71 = arith.addf %67, %70 : vector<16x8xf32>
    %c1_54 = arith.constant 1 : index
    %c0_55 = arith.constant 0 : index
    %c0_56 = arith.constant 0 : index
    %72 = vector.load %arg8[%c1_54, %c0_55, %c0_56] : memref<4x32x8xf32, #tpu.memory_space<vmem>>, vector<1x32x8xf32>
    %73 = vector.shape_cast %72 : vector<1x32x8xf32> to vector<32x8xf32>
    %cst_57 = arith.constant dense<0.000000e+00> : vector<16x8xf32>
    %74 = tpu.matmul %2, %73, %cst_57 {dimension_numbers = #tpu.dot_dimension_numbers<[1], [0], [0], [1], [0, 0, 1, 1], [], []>} : vector<16x32xf32>, vector<32x8xf32>, vector<16x8xf32> -> vector<16x8xf32>
    %c1_58 = arith.constant 1 : index
    %c0_59 = arith.constant 0 : index
    %c0_60 = arith.constant 0 : index
    %75 = vector.load %arg9[%c1_58, %c0_59, %c0_60] : memref<4x1x8xf32, #tpu.memory_space<vmem>>, vector<1x1x8xf32>
    %76 = vector.shape_cast %75 : vector<1x1x8xf32> to vector<1x8xf32>
    %77 = vector.broadcast %76 : vector<1x8xf32> to vector<16x8xf32>
    %78 = arith.addf %74, %77 : vector<16x8xf32>
    %79 = vector.extract_strided_slice %64 {offsets = [0, 0], sizes = [8, 8], strides = [1, 1]} : vector<16x8xf32> to vector<8x8xf32>
    %80 = vector.extract_strided_slice %71 {offsets = [0, 0], sizes = [8, 8], strides = [1, 1]} : vector<16x8xf32> to vector<8x8xf32>
    %81 = vector.extract_strided_slice %78 {offsets = [0, 0], sizes = [8, 8], strides = [1, 1]} : vector<16x8xf32> to vector<8x8xf32>
    %cst_61 = arith.constant dense<0.000000e+00> : vector<8x8xf32>
    %82 = tpu.matmul %79, %80, %cst_61 {dimension_numbers = #tpu.dot_dimension_numbers<[1], [1], [0], [0], [0, 0, 1, 0], [], []>} : vector<8x8xf32>, vector<8x8xf32>, vector<8x8xf32> -> vector<8x8xf32>
    %cst_62 = arith.constant dense<0xFF800000> : vector<8xf32>
    %83 = vector.multi_reduction <maximumf>, %82, %cst_62 [1] : vector<8x8xf32> to vector<8xf32>
    %84 = vector.shape_cast %83 : vector<8xf32> to vector<8x1xf32>
    %85 = vector.broadcast %84 : vector<8x1xf32> to vector<8x8xf32>
    %86 = arith.subf %82, %85 : vector<8x8xf32>
    %87 = math.exp %86 : vector<8x8xf32>
    %cst_63 = arith.constant dense<0.000000e+00> : vector<8xf32>
    %88 = vector.multi_reduction <add>, %87, %cst_63 [1] : vector<8x8xf32> to vector<8xf32>
    %89 = vector.shape_cast %88 : vector<8xf32> to vector<8x1xf32>
    %90 = vector.broadcast %89 : vector<8x1xf32> to vector<8x8xf32>
    %91 = arith.divf %87, %90 : vector<8x8xf32>
    %cst_64 = arith.constant dense<0.000000e+00> : vector<8x8xf32>
    %92 = tpu.matmul %91, %81, %cst_64 {dimension_numbers = #tpu.dot_dimension_numbers<[1], [0], [0], [1], [0, 0, 1, 1], [], []>} : vector<8x8xf32>, vector<8x8xf32>, vector<8x8xf32> -> vector<8x8xf32>
    %c1_65 = arith.constant 1 : index
    %c0_66 = arith.constant 0 : index
    %c0_67 = arith.constant 0 : index
    %93 = vector.load %arg10[%c1_65, %c0_66, %c0_67] : memref<4x8x32xf32, #tpu.memory_space<vmem>>, vector<1x8x32xf32>
    %94 = vector.shape_cast %93 : vector<1x8x32xf32> to vector<8x32xf32>
    %cst_68 = arith.constant dense<0.000000e+00> : vector<8x32xf32>
    %95 = tpu.matmul %92, %94, %cst_68 {dimension_numbers = #tpu.dot_dimension_numbers<[1], [0], [0], [1], [0, 0, 1, 1], [], []>} : vector<8x8xf32>, vector<8x32xf32>, vector<8x32xf32> -> vector<8x32xf32>
    %96 = arith.addf %40, %95 : vector<8x32xf32>
    %97 = vector.extract_strided_slice %64 {offsets = [8, 0], sizes = [8, 8], strides = [1, 1]} : vector<16x8xf32> to vector<8x8xf32>
    %98 = vector.extract_strided_slice %71 {offsets = [8, 0], sizes = [8, 8], strides = [1, 1]} : vector<16x8xf32> to vector<8x8xf32>
    %99 = vector.extract_strided_slice %78 {offsets = [8, 0], sizes = [8, 8], strides = [1, 1]} : vector<16x8xf32> to vector<8x8xf32>
    %cst_69 = arith.constant dense<0.000000e+00> : vector<8x8xf32>
    %100 = tpu.matmul %97, %98, %cst_69 {dimension_numbers = #tpu.dot_dimension_numbers<[1], [1], [0], [0], [0, 0, 1, 0], [], []>} : vector<8x8xf32>, vector<8x8xf32>, vector<8x8xf32> -> vector<8x8xf32>
    %cst_70 = arith.constant dense<0xFF800000> : vector<8xf32>
    %101 = vector.multi_reduction <maximumf>, %100, %cst_70 [1] : vector<8x8xf32> to vector<8xf32>
    %102 = vector.shape_cast %101 : vector<8xf32> to vector<8x1xf32>
    %103 = vector.broadcast %102 : vector<8x1xf32> to vector<8x8xf32>
    %104 = arith.subf %100, %103 : vector<8x8xf32>
    %105 = math.exp %104 : vector<8x8xf32>
    %cst_71 = arith.constant dense<0.000000e+00> : vector<8xf32>
    %106 = vector.multi_reduction <add>, %105, %cst_71 [1] : vector<8x8xf32> to vector<8xf32>
    %107 = vector.shape_cast %106 : vector<8xf32> to vector<8x1xf32>
    %108 = vector.broadcast %107 : vector<8x1xf32> to vector<8x8xf32>
    %109 = arith.divf %105, %108 : vector<8x8xf32>
    %cst_72 = arith.constant dense<0.000000e+00> : vector<8x8xf32>
    %110 = tpu.matmul %109, %99, %cst_72 {dimension_numbers = #tpu.dot_dimension_numbers<[1], [0], [0], [1], [0, 0, 1, 1], [], []>} : vector<8x8xf32>, vector<8x8xf32>, vector<8x8xf32> -> vector<8x8xf32>
    %c1_73 = arith.constant 1 : index
    %c0_74 = arith.constant 0 : index
    %c0_75 = arith.constant 0 : index
    %111 = vector.load %arg10[%c1_73, %c0_74, %c0_75] : memref<4x8x32xf32, #tpu.memory_space<vmem>>, vector<1x8x32xf32>
    %112 = vector.shape_cast %111 : vector<1x8x32xf32> to vector<8x32xf32>
    %cst_76 = arith.constant dense<0.000000e+00> : vector<8x32xf32>
    %113 = tpu.matmul %110, %112, %cst_76 {dimension_numbers = #tpu.dot_dimension_numbers<[1], [0], [0], [1], [0, 0, 1, 1], [], []>} : vector<8x8xf32>, vector<8x32xf32>, vector<8x32xf32> -> vector<8x32xf32>
    %114 = arith.addf %57, %113 : vector<8x32xf32>
    %c2 = arith.constant 2 : index
    %c0_77 = arith.constant 0 : index
    %c0_78 = arith.constant 0 : index
    %115 = vector.load %arg4[%c2, %c0_77, %c0_78] : memref<4x32x8xf32, #tpu.memory_space<vmem>>, vector<1x32x8xf32>
    %116 = vector.shape_cast %115 : vector<1x32x8xf32> to vector<32x8xf32>
    %cst_79 = arith.constant dense<0.000000e+00> : vector<16x8xf32>
    %117 = tpu.matmul %0, %116, %cst_79 {dimension_numbers = #tpu.dot_dimension_numbers<[1], [0], [0], [1], [0, 0, 1, 1], [], []>} : vector<16x32xf32>, vector<32x8xf32>, vector<16x8xf32> -> vector<16x8xf32>
    %c2_80 = arith.constant 2 : index
    %c0_81 = arith.constant 0 : index
    %c0_82 = arith.constant 0 : index
    %118 = vector.load %arg5[%c2_80, %c0_81, %c0_82] : memref<4x1x8xf32, #tpu.memory_space<vmem>>, vector<1x1x8xf32>
    %119 = vector.shape_cast %118 : vector<1x1x8xf32> to vector<1x8xf32>
    %120 = vector.broadcast %119 : vector<1x8xf32> to vector<16x8xf32>
    %121 = arith.addf %117, %120 : vector<16x8xf32>
    %c2_83 = arith.constant 2 : index
    %c0_84 = arith.constant 0 : index
    %c0_85 = arith.constant 0 : index
    %122 = vector.load %arg6[%c2_83, %c0_84, %c0_85] : memref<4x32x8xf32, #tpu.memory_space<vmem>>, vector<1x32x8xf32>
    %123 = vector.shape_cast %122 : vector<1x32x8xf32> to vector<32x8xf32>
    %cst_86 = arith.constant dense<0.000000e+00> : vector<16x8xf32>
    %124 = tpu.matmul %1, %123, %cst_86 {dimension_numbers = #tpu.dot_dimension_numbers<[1], [0], [0], [1], [0, 0, 1, 1], [], []>} : vector<16x32xf32>, vector<32x8xf32>, vector<16x8xf32> -> vector<16x8xf32>
    %c2_87 = arith.constant 2 : index
    %c0_88 = arith.constant 0 : index
    %c0_89 = arith.constant 0 : index
    %125 = vector.load %arg7[%c2_87, %c0_88, %c0_89] : memref<4x1x8xf32, #tpu.memory_space<vmem>>, vector<1x1x8xf32>
    %126 = vector.shape_cast %125 : vector<1x1x8xf32> to vector<1x8xf32>
    %127 = vector.broadcast %126 : vector<1x8xf32> to vector<16x8xf32>
    %128 = arith.addf %124, %127 : vector<16x8xf32>
    %c2_90 = arith.constant 2 : index
    %c0_91 = arith.constant 0 : index
    %c0_92 = arith.constant 0 : index
    %129 = vector.load %arg8[%c2_90, %c0_91, %c0_92] : memref<4x32x8xf32, #tpu.memory_space<vmem>>, vector<1x32x8xf32>
    %130 = vector.shape_cast %129 : vector<1x32x8xf32> to vector<32x8xf32>
    %cst_93 = arith.constant dense<0.000000e+00> : vector<16x8xf32>
    %131 = tpu.matmul %2, %130, %cst_93 {dimension_numbers = #tpu.dot_dimension_numbers<[1], [0], [0], [1], [0, 0, 1, 1], [], []>} : vector<16x32xf32>, vector<32x8xf32>, vector<16x8xf32> -> vector<16x8xf32>
    %c2_94 = arith.constant 2 : index
    %c0_95 = arith.constant 0 : index
    %c0_96 = arith.constant 0 : index
    %132 = vector.load %arg9[%c2_94, %c0_95, %c0_96] : memref<4x1x8xf32, #tpu.memory_space<vmem>>, vector<1x1x8xf32>
    %133 = vector.shape_cast %132 : vector<1x1x8xf32> to vector<1x8xf32>
    %134 = vector.broadcast %133 : vector<1x8xf32> to vector<16x8xf32>
    %135 = arith.addf %131, %134 : vector<16x8xf32>
    %136 = vector.extract_strided_slice %121 {offsets = [0, 0], sizes = [8, 8], strides = [1, 1]} : vector<16x8xf32> to vector<8x8xf32>
    %137 = vector.extract_strided_slice %128 {offsets = [0, 0], sizes = [8, 8], strides = [1, 1]} : vector<16x8xf32> to vector<8x8xf32>
    %138 = vector.extract_strided_slice %135 {offsets = [0, 0], sizes = [8, 8], strides = [1, 1]} : vector<16x8xf32> to vector<8x8xf32>
    %cst_97 = arith.constant dense<0.000000e+00> : vector<8x8xf32>
    %139 = tpu.matmul %136, %137, %cst_97 {dimension_numbers = #tpu.dot_dimension_numbers<[1], [1], [0], [0], [0, 0, 1, 0], [], []>} : vector<8x8xf32>, vector<8x8xf32>, vector<8x8xf32> -> vector<8x8xf32>
    %cst_98 = arith.constant dense<0xFF800000> : vector<8xf32>
    %140 = vector.multi_reduction <maximumf>, %139, %cst_98 [1] : vector<8x8xf32> to vector<8xf32>
    %141 = vector.shape_cast %140 : vector<8xf32> to vector<8x1xf32>
    %142 = vector.broadcast %141 : vector<8x1xf32> to vector<8x8xf32>
    %143 = arith.subf %139, %142 : vector<8x8xf32>
    %144 = math.exp %143 : vector<8x8xf32>
    %cst_99 = arith.constant dense<0.000000e+00> : vector<8xf32>
    %145 = vector.multi_reduction <add>, %144, %cst_99 [1] : vector<8x8xf32> to vector<8xf32>
    %146 = vector.shape_cast %145 : vector<8xf32> to vector<8x1xf32>
    %147 = vector.broadcast %146 : vector<8x1xf32> to vector<8x8xf32>
    %148 = arith.divf %144, %147 : vector<8x8xf32>
    %cst_100 = arith.constant dense<0.000000e+00> : vector<8x8xf32>
    %149 = tpu.matmul %148, %138, %cst_100 {dimension_numbers = #tpu.dot_dimension_numbers<[1], [0], [0], [1], [0, 0, 1, 1], [], []>} : vector<8x8xf32>, vector<8x8xf32>, vector<8x8xf32> -> vector<8x8xf32>
    %c2_101 = arith.constant 2 : index
    %c0_102 = arith.constant 0 : index
    %c0_103 = arith.constant 0 : index
    %150 = vector.load %arg10[%c2_101, %c0_102, %c0_103] : memref<4x8x32xf32, #tpu.memory_space<vmem>>, vector<1x8x32xf32>
    %151 = vector.shape_cast %150 : vector<1x8x32xf32> to vector<8x32xf32>
    %cst_104 = arith.constant dense<0.000000e+00> : vector<8x32xf32>
    %152 = tpu.matmul %149, %151, %cst_104 {dimension_numbers = #tpu.dot_dimension_numbers<[1], [0], [0], [1], [0, 0, 1, 1], [], []>} : vector<8x8xf32>, vector<8x32xf32>, vector<8x32xf32> -> vector<8x32xf32>
    %153 = arith.addf %96, %152 : vector<8x32xf32>
    %154 = vector.extract_strided_slice %121 {offsets = [8, 0], sizes = [8, 8], strides = [1, 1]} : vector<16x8xf32> to vector<8x8xf32>
    %155 = vector.extract_strided_slice %128 {offsets = [8, 0], sizes = [8, 8], strides = [1, 1]} : vector<16x8xf32> to vector<8x8xf32>
    %156 = vector.extract_strided_slice %135 {offsets = [8, 0], sizes = [8, 8], strides = [1, 1]} : vector<16x8xf32> to vector<8x8xf32>
    %cst_105 = arith.constant dense<0.000000e+00> : vector<8x8xf32>
    %157 = tpu.matmul %154, %155, %cst_105 {dimension_numbers = #tpu.dot_dimension_numbers<[1], [1], [0], [0], [0, 0, 1, 0], [], []>} : vector<8x8xf32>, vector<8x8xf32>, vector<8x8xf32> -> vector<8x8xf32>
    %cst_106 = arith.constant dense<0xFF800000> : vector<8xf32>
    %158 = vector.multi_reduction <maximumf>, %157, %cst_106 [1] : vector<8x8xf32> to vector<8xf32>
    %159 = vector.shape_cast %158 : vector<8xf32> to vector<8x1xf32>
    %160 = vector.broadcast %159 : vector<8x1xf32> to vector<8x8xf32>
    %161 = arith.subf %157, %160 : vector<8x8xf32>
    %162 = math.exp %161 : vector<8x8xf32>
    %cst_107 = arith.constant dense<0.000000e+00> : vector<8xf32>
    %163 = vector.multi_reduction <add>, %162, %cst_107 [1] : vector<8x8xf32> to vector<8xf32>
    %164 = vector.shape_cast %163 : vector<8xf32> to vector<8x1xf32>
    %165 = vector.broadcast %164 : vector<8x1xf32> to vector<8x8xf32>
    %166 = arith.divf %162, %165 : vector<8x8xf32>
    %cst_108 = arith.constant dense<0.000000e+00> : vector<8x8xf32>
    %167 = tpu.matmul %166, %156, %cst_108 {dimension_numbers = #tpu.dot_dimension_numbers<[1], [0], [0], [1], [0, 0, 1, 1], [], []>} : vector<8x8xf32>, vector<8x8xf32>, vector<8x8xf32> -> vector<8x8xf32>
    %c2_109 = arith.constant 2 : index
    %c0_110 = arith.constant 0 : index
    %c0_111 = arith.constant 0 : index
    %168 = vector.load %arg10[%c2_109, %c0_110, %c0_111] : memref<4x8x32xf32, #tpu.memory_space<vmem>>, vector<1x8x32xf32>
    %169 = vector.shape_cast %168 : vector<1x8x32xf32> to vector<8x32xf32>
    %cst_112 = arith.constant dense<0.000000e+00> : vector<8x32xf32>
    %170 = tpu.matmul %167, %169, %cst_112 {dimension_numbers = #tpu.dot_dimension_numbers<[1], [0], [0], [1], [0, 0, 1, 1], [], []>} : vector<8x8xf32>, vector<8x32xf32>, vector<8x32xf32> -> vector<8x32xf32>
    %171 = arith.addf %114, %170 : vector<8x32xf32>
    %c3 = arith.constant 3 : index
    %c0_113 = arith.constant 0 : index
    %c0_114 = arith.constant 0 : index
    %172 = vector.load %arg4[%c3, %c0_113, %c0_114] : memref<4x32x8xf32, #tpu.memory_space<vmem>>, vector<1x32x8xf32>
    %173 = vector.shape_cast %172 : vector<1x32x8xf32> to vector<32x8xf32>
    %cst_115 = arith.constant dense<0.000000e+00> : vector<16x8xf32>
    %174 = tpu.matmul %0, %173, %cst_115 {dimension_numbers = #tpu.dot_dimension_numbers<[1], [0], [0], [1], [0, 0, 1, 1], [], []>} : vector<16x32xf32>, vector<32x8xf32>, vector<16x8xf32> -> vector<16x8xf32>
    %c3_116 = arith.constant 3 : index
    %c0_117 = arith.constant 0 : index
    %c0_118 = arith.constant 0 : index
    %175 = vector.load %arg5[%c3_116, %c0_117, %c0_118] : memref<4x1x8xf32, #tpu.memory_space<vmem>>, vector<1x1x8xf32>
    %176 = vector.shape_cast %175 : vector<1x1x8xf32> to vector<1x8xf32>
    %177 = vector.broadcast %176 : vector<1x8xf32> to vector<16x8xf32>
    %178 = arith.addf %174, %177 : vector<16x8xf32>
    %c3_119 = arith.constant 3 : index
    %c0_120 = arith.constant 0 : index
    %c0_121 = arith.constant 0 : index
    %179 = vector.load %arg6[%c3_119, %c0_120, %c0_121] : memref<4x32x8xf32, #tpu.memory_space<vmem>>, vector<1x32x8xf32>
    %180 = vector.shape_cast %179 : vector<1x32x8xf32> to vector<32x8xf32>
    %cst_122 = arith.constant dense<0.000000e+00> : vector<16x8xf32>
    %181 = tpu.matmul %1, %180, %cst_122 {dimension_numbers = #tpu.dot_dimension_numbers<[1], [0], [0], [1], [0, 0, 1, 1], [], []>} : vector<16x32xf32>, vector<32x8xf32>, vector<16x8xf32> -> vector<16x8xf32>
    %c3_123 = arith.constant 3 : index
    %c0_124 = arith.constant 0 : index
    %c0_125 = arith.constant 0 : index
    %182 = vector.load %arg7[%c3_123, %c0_124, %c0_125] : memref<4x1x8xf32, #tpu.memory_space<vmem>>, vector<1x1x8xf32>
    %183 = vector.shape_cast %182 : vector<1x1x8xf32> to vector<1x8xf32>
    %184 = vector.broadcast %183 : vector<1x8xf32> to vector<16x8xf32>
    %185 = arith.addf %181, %184 : vector<16x8xf32>
    %c3_126 = arith.constant 3 : index
    %c0_127 = arith.constant 0 : index
    %c0_128 = arith.constant 0 : index
    %186 = vector.load %arg8[%c3_126, %c0_127, %c0_128] : memref<4x32x8xf32, #tpu.memory_space<vmem>>, vector<1x32x8xf32>
    %187 = vector.shape_cast %186 : vector<1x32x8xf32> to vector<32x8xf32>
    %cst_129 = arith.constant dense<0.000000e+00> : vector<16x8xf32>
    %188 = tpu.matmul %2, %187, %cst_129 {dimension_numbers = #tpu.dot_dimension_numbers<[1], [0], [0], [1], [0, 0, 1, 1], [], []>} : vector<16x32xf32>, vector<32x8xf32>, vector<16x8xf32> -> vector<16x8xf32>
    %c3_130 = arith.constant 3 : index
    %c0_131 = arith.constant 0 : index
    %c0_132 = arith.constant 0 : index
    %189 = vector.load %arg9[%c3_130, %c0_131, %c0_132] : memref<4x1x8xf32, #tpu.memory_space<vmem>>, vector<1x1x8xf32>
    %190 = vector.shape_cast %189 : vector<1x1x8xf32> to vector<1x8xf32>
    %191 = vector.broadcast %190 : vector<1x8xf32> to vector<16x8xf32>
    %192 = arith.addf %188, %191 : vector<16x8xf32>
    %193 = vector.extract_strided_slice %178 {offsets = [0, 0], sizes = [8, 8], strides = [1, 1]} : vector<16x8xf32> to vector<8x8xf32>
    %194 = vector.extract_strided_slice %185 {offsets = [0, 0], sizes = [8, 8], strides = [1, 1]} : vector<16x8xf32> to vector<8x8xf32>
    %195 = vector.extract_strided_slice %192 {offsets = [0, 0], sizes = [8, 8], strides = [1, 1]} : vector<16x8xf32> to vector<8x8xf32>
    %cst_133 = arith.constant dense<0.000000e+00> : vector<8x8xf32>
    %196 = tpu.matmul %193, %194, %cst_133 {dimension_numbers = #tpu.dot_dimension_numbers<[1], [1], [0], [0], [0, 0, 1, 0], [], []>} : vector<8x8xf32>, vector<8x8xf32>, vector<8x8xf32> -> vector<8x8xf32>
    %cst_134 = arith.constant dense<0xFF800000> : vector<8xf32>
    %197 = vector.multi_reduction <maximumf>, %196, %cst_134 [1] : vector<8x8xf32> to vector<8xf32>
    %198 = vector.shape_cast %197 : vector<8xf32> to vector<8x1xf32>
    %199 = vector.broadcast %198 : vector<8x1xf32> to vector<8x8xf32>
    %200 = arith.subf %196, %199 : vector<8x8xf32>
    %201 = math.exp %200 : vector<8x8xf32>
    %cst_135 = arith.constant dense<0.000000e+00> : vector<8xf32>
    %202 = vector.multi_reduction <add>, %201, %cst_135 [1] : vector<8x8xf32> to vector<8xf32>
    %203 = vector.shape_cast %202 : vector<8xf32> to vector<8x1xf32>
    %204 = vector.broadcast %203 : vector<8x1xf32> to vector<8x8xf32>
    %205 = arith.divf %201, %204 : vector<8x8xf32>
    %cst_136 = arith.constant dense<0.000000e+00> : vector<8x8xf32>
    %206 = tpu.matmul %205, %195, %cst_136 {dimension_numbers = #tpu.dot_dimension_numbers<[1], [0], [0], [1], [0, 0, 1, 1], [], []>} : vector<8x8xf32>, vector<8x8xf32>, vector<8x8xf32> -> vector<8x8xf32>
    %c3_137 = arith.constant 3 : index
    %c0_138 = arith.constant 0 : index
    %c0_139 = arith.constant 0 : index
    %207 = vector.load %arg10[%c3_137, %c0_138, %c0_139] : memref<4x8x32xf32, #tpu.memory_space<vmem>>, vector<1x8x32xf32>
    %208 = vector.shape_cast %207 : vector<1x8x32xf32> to vector<8x32xf32>
    %cst_140 = arith.constant dense<0.000000e+00> : vector<8x32xf32>
    %209 = tpu.matmul %206, %208, %cst_140 {dimension_numbers = #tpu.dot_dimension_numbers<[1], [0], [0], [1], [0, 0, 1, 1], [], []>} : vector<8x8xf32>, vector<8x32xf32>, vector<8x32xf32> -> vector<8x32xf32>
    %210 = arith.addf %153, %209 : vector<8x32xf32>
    %211 = vector.extract_strided_slice %178 {offsets = [8, 0], sizes = [8, 8], strides = [1, 1]} : vector<16x8xf32> to vector<8x8xf32>
    %212 = vector.extract_strided_slice %185 {offsets = [8, 0], sizes = [8, 8], strides = [1, 1]} : vector<16x8xf32> to vector<8x8xf32>
    %213 = vector.extract_strided_slice %192 {offsets = [8, 0], sizes = [8, 8], strides = [1, 1]} : vector<16x8xf32> to vector<8x8xf32>
    %cst_141 = arith.constant dense<0.000000e+00> : vector<8x8xf32>
    %214 = tpu.matmul %211, %212, %cst_141 {dimension_numbers = #tpu.dot_dimension_numbers<[1], [1], [0], [0], [0, 0, 1, 0], [], []>} : vector<8x8xf32>, vector<8x8xf32>, vector<8x8xf32> -> vector<8x8xf32>
    %cst_142 = arith.constant dense<0xFF800000> : vector<8xf32>
    %215 = vector.multi_reduction <maximumf>, %214, %cst_142 [1] : vector<8x8xf32> to vector<8xf32>
    %216 = vector.shape_cast %215 : vector<8xf32> to vector<8x1xf32>
    %217 = vector.broadcast %216 : vector<8x1xf32> to vector<8x8xf32>
    %218 = arith.subf %214, %217 : vector<8x8xf32>
    %219 = math.exp %218 : vector<8x8xf32>
    %cst_143 = arith.constant dense<0.000000e+00> : vector<8xf32>
    %220 = vector.multi_reduction <add>, %219, %cst_143 [1] : vector<8x8xf32> to vector<8xf32>
    %221 = vector.shape_cast %220 : vector<8xf32> to vector<8x1xf32>
    %222 = vector.broadcast %221 : vector<8x1xf32> to vector<8x8xf32>
    %223 = arith.divf %219, %222 : vector<8x8xf32>
    %cst_144 = arith.constant dense<0.000000e+00> : vector<8x8xf32>
    %224 = tpu.matmul %223, %213, %cst_144 {dimension_numbers = #tpu.dot_dimension_numbers<[1], [0], [0], [1], [0, 0, 1, 1], [], []>} : vector<8x8xf32>, vector<8x8xf32>, vector<8x8xf32> -> vector<8x8xf32>
    %c3_145 = arith.constant 3 : index
    %c0_146 = arith.constant 0 : index
    %c0_147 = arith.constant 0 : index
    %225 = vector.load %arg10[%c3_145, %c0_146, %c0_147] : memref<4x8x32xf32, #tpu.memory_space<vmem>>, vector<1x8x32xf32>
    %226 = vector.shape_cast %225 : vector<1x8x32xf32> to vector<8x32xf32>
    %cst_148 = arith.constant dense<0.000000e+00> : vector<8x32xf32>
    %227 = tpu.matmul %224, %226, %cst_148 {dimension_numbers = #tpu.dot_dimension_numbers<[1], [0], [0], [1], [0, 0, 1, 1], [], []>} : vector<8x8xf32>, vector<8x32xf32>, vector<8x32xf32> -> vector<8x32xf32>
    %228 = arith.addf %171, %227 : vector<8x32xf32>
    %c0_149 = arith.constant 0 : index
    %c0_150 = arith.constant 0 : index
    %229 = vector.load %arg11[%c0_149, %c0_150] : memref<1x32xf32, #tpu.memory_space<vmem>>, vector<1x32xf32>
    %230 = vector.broadcast %229 : vector<1x32xf32> to vector<8x32xf32>
    %231 = arith.addf %210, %230 : vector<8x32xf32>
    %c0_151 = arith.constant 0 : index
    %c0_152 = arith.constant 0 : index
    %232 = vector.load %arg12[%c0_151, %c0_152] : memref<16x32xf32, #tpu.memory_space<vmem>>, vector<8x32xf32>
    tpu.vector_store %arg12[%c0_151, %c0_152], %231 {strides = array<i32>} : memref<16x32xf32, #tpu.memory_space<vmem>>, vector<8x32xf32>,
    %233 = vector.broadcast %229 : vector<1x32xf32> to vector<8x32xf32>
    %234 = arith.addf %228, %233 : vector<8x32xf32>
    %c8 = arith.constant 8 : index
    %c0_153 = arith.constant 0 : index
    %235 = vector.load %arg12[%c8, %c0_153] : memref<16x32xf32, #tpu.memory_space<vmem>>, vector<8x32xf32>
    tpu.vector_store %arg12[%c8, %c0_153], %234 {strides = array<i32>} : memref<16x32xf32, #tpu.memory_space<vmem>>, vector<8x32xf32>,
    return
  }
  func.func @transform_0(%arg0: i32) -> (i32, i32) {
    %c0_i32 = arith.constant 0 : i32
    %c0_i32_0 = arith.constant 0 : i32
    %c0_i32_1 = arith.constant 0 : i32
    return %c0_i32, %c0_i32_0 : i32, i32
  }
  func.func @transform_1(%arg0: i32) -> (i32, i32) {
    %c0_i32 = arith.constant 0 : i32
    %c0_i32_0 = arith.constant 0 : i32
    %c0_i32_1 = arith.constant 0 : i32
    return %c0_i32, %c0_i32_0 : i32, i32
  }
  func.func @transform_2(%arg0: i32) -> (i32, i32) {
    %c0_i32 = arith.constant 0 : i32
    %c0_i32_0 = arith.constant 0 : i32
    %c0_i32_1 = arith.constant 0 : i32
    return %c0_i32, %c0_i32_0 : i32, i32
  }
  func.func @transform_3(%arg0: i32) -> (i32, i32, i32) {
    %c0_i32 = arith.constant 0 : i32
    %c0_i32_0 = arith.constant 0 : i32
    %c0_i32_1 = arith.constant 0 : i32
    %c0_i32_2 = arith.constant 0 : i32
    return %c0_i32, %c0_i32_0, %c0_i32_1 : i32, i32, i32
  }
  func.func @transform_4(%arg0: i32) -> (i32, i32, i32) {
    %c0_i32 = arith.constant 0 : i32
    %c0_i32_0 = arith.constant 0 : i32
    %c0_i32_1 = arith.constant 0 : i32
    %c0_i32_2 = arith.constant 0 : i32
    return %c0_i32, %c0_i32_0, %c0_i32_1 : i32, i32, i32
  }
  func.func @transform_5(%arg0: i32) -> (i32, i32, i32) {
    %c0_i32 = arith.constant 0 : i32
    %c0_i32_0 = arith.constant 0 : i32
    %c0_i32_1 = arith.constant 0 : i32
    %c0_i32_2 = arith.constant 0 : i32
    return %c0_i32, %c0_i32_0, %c0_i32_1 : i32, i32, i32
  }
  func.func @transform_6(%arg0: i32) -> (i32, i32, i32) {
    %c0_i32 = arith.constant 0 : i32
    %c0_i32_0 = arith.constant 0 : i32
    %c0_i32_1 = arith.constant 0 : i32
    %c0_i32_2 = arith.constant 0 : i32
    return %c0_i32, %c0_i32_0, %c0_i32_1 : i32, i32, i32
  }
  func.func @transform_7(%arg0: i32) -> (i32, i32, i32) {
    %c0_i32 = arith.constant 0 : i32
    %c0_i32_0 = arith.constant 0 : i32
    %c0_i32_1 = arith.constant 0 : i32
    %c0_i32_2 = arith.constant 0 : i32
    return %c0_i32, %c0_i32_0, %c0_i32_1 : i32, i32, i32
  }
  func.func @transform_8(%arg0: i32) -> (i32, i32, i32) {
    %c0_i32 = arith.constant 0 : i32
    %c0_i32_0 = arith.constant 0 : i32
    %c0_i32_1 = arith.constant 0 : i32
    %c0_i32_2 = arith.constant 0 : i32
    return %c0_i32, %c0_i32_0, %c0_i32_1 : i32, i32, i32
  }
  func.func @transform_9(%arg0: i32) -> (i32, i32, i32) {
    %c0_i32 = arith.constant 0 : i32
    %c0_i32_0 = arith.constant 0 : i32
    %c0_i32_1 = arith.constant 0 : i32
    %c0_i32_2 = arith.constant 0 : i32
    return %c0_i32, %c0_i32_0, %c0_i32_1 : i32, i32, i32
  }
  func.func @transform_10(%arg0: i32) -> (i32, i32) {
    %c0_i32 = arith.constant 0 : i32
    %c0_i32_0 = arith.constant 0 : i32
    %c0_i32_1 = arith.constant 0 : i32
    return %c0_i32, %c0_i32_0 : i32, i32
  }
  func.func @transform_11(%arg0: i32) -> (i32, i32) {
    %c0_i32 = arith.constant 0 : i32
    %c0_i32_0 = arith.constant 0 : i32
    %c0_i32_1 = arith.constant 0 : i32
    return %c0_i32, %c0_i32_0 : i32, i32
  }
}

</mosaic_0001>

<llo_original>
// kernel: cross_attention.1
$region0: #{cross_attention.1}
  #allocation0 [shape = 'u32[]', space=smem, size = 0x4, offset = 0x4, fixed_abs, tag = 'smem constant byte address 0x4 - core index']
  #allocation1 [shape = 'u32[72,128]{1,0:T(1,128)}', space=vmem, size = 0x9000, scoped, tag = 'internal scratch']
  %s0 = inlined_call_operand.vmem [shape: f32[16,32], index: 0, kind: input, shape index: {}]
  %s1 = inlined_call_operand.vmem [shape: f32[16,32], index: 1, kind: input, shape index: {}]
  %s2 = inlined_call_operand.vmem [shape: f32[16,32], index: 2, kind: input, shape index: {}]
  %s3 = inlined_call_operand.vmem [shape: f32[4,32,8], index: 3, kind: input, shape index: {}]
  %s4 = inlined_call_operand.vmem [shape: f32[4,1,8], index: 4, kind: input, shape index: {}]
  %s5 = inlined_call_operand.vmem [shape: f32[4,32,8], index: 5, kind: input, shape index: {}]
  %s6 = inlined_call_operand.vmem [shape: f32[4,1,8], index: 6, kind: input, shape index: {}]
  %s7 = inlined_call_operand.vmem [shape: f32[4,32,8], index: 7, kind: input, shape index: {}]
  %s8 = inlined_call_operand.vmem [shape: f32[4,1,8], index: 8, kind: input, shape index: {}]
  %s9 = inlined_call_operand.vmem [shape: f32[4,8,32], index: 9, kind: input, shape index: {}]
  %s10 = inlined_call_operand.vmem [shape: f32[1,32], index: 10, kind: input, shape index: {}]
  %s11 = inlined_call_operand.hbm [shape: f32[16,32], index: 11, kind: output, shape index: {}]
  %s12 = sld [smem:[#allocation0]]
  $region54: #{cross_attention.1} parent=0
    _
  %s14 = ssub.s32 1, %s12
  %s15 = scalar_select 0, %s14, %s12
  $region1: #{cross_attention.1} parent=0
    #allocation2 [shape = 'u8[8192]{0}', space=vmem, size = 0x2000, scoped, tag = 'output window, operand 0, single buffered']
    #allocation3 [shape = 's32[1]{0}', space=sflag, size = 0x4, scoped, tag = 'scoped memory for cross_attention.1']
    %16 = vsyncpa [#allocation3], 0
    // Predicated region
    $region2: #{cross_attention.1} parent=1 // pred_check
      _
    $region3: #{cross_attention.1} parent=1 // pred_check_branch
      %18 = sbr.rel (0) target = $region5
    $region4: #{cross_attention.1} parent=1 // pred_region
      _
    $region5: #{cross_attention.1} parent=1 // pred_fallthru
      _
    // Predicated region
    $region6: #{cross_attention.1} parent=1 // pred_check
      _
    $region7: #{cross_attention.1} parent=1 // pred_check_branch
      %20 = sbr.rel (0) target = $region9
    $region8: #{cross_attention.1} parent=1 // pred_region
      _
    $region9: #{cross_attention.1} parent=1 // pred_fallthru
      _
    // Predicated region
    $region10: #{cross_attention.1} parent=1 // pred_check
      _
    $region11: #{cross_attention.1} parent=1 // pred_check_branch
      %22 = sbr.rel (0) target = $region13
    $region12: #{cross_attention.1} parent=1 // pred_region
      _
    $region13: #{cross_attention.1} parent=1 // pred_fallthru
      _
    // Predicated region
    $region14: #{cross_attention.1} parent=1 // pred_check
      _
    $region15: #{cross_attention.1} parent=1 // pred_check_branch
      %24 = sbr.rel (0) target = $region17
    $region16: #{cross_attention.1} parent=1 // pred_region
      _
    $region17: #{cross_attention.1} parent=1 // pred_fallthru
      _
    // Predicated region
    $region18: #{cross_attention.1} parent=1 // pred_check
      _
    $region19: #{cross_attention.1} parent=1 // pred_check_branch
      %26 = sbr.rel (0) target = $region21
    $region20: #{cross_attention.1} parent=1 // pred_region
      _
    $region21: #{cross_attention.1} parent=1 // pred_fallthru
      _
    // Predicated region
    $region22: #{cross_attention.1} parent=1 // pred_check
      _
    $region23: #{cross_attention.1} parent=1 // pred_check_branch
      %28 = sbr.rel (0) target = $region25
    $region24: #{cross_attention.1} parent=1 // pred_region
      _
    $region25: #{cross_attention.1} parent=1 // pred_fallthru
      _
    // Predicated region
    $region26: #{cross_attention.1} parent=1 // pred_check
      _
    $region27: #{cross_attention.1} parent=1 // pred_check_branch
      %30 = sbr.rel (0) target = $region29
    $region28: #{cross_attention.1} parent=1 // pred_region
      _
    $region29: #{cross_attention.1} parent=1 // pred_fallthru
      _
    // Predicated region
    $region30: #{cross_attention.1} parent=1 // pred_check
      _
    $region31: #{cross_attention.1} parent=1 // pred_check_branch
      %32 = sbr.rel (0) target = $region33
    $region32: #{cross_attention.1} parent=1 // pred_region
      _
    $region33: #{cross_attention.1} parent=1 // pred_fallthru
      _
    // Predicated region
    $region34: #{cross_attention.1} parent=1 // pred_check
      _
    $region35: #{cross_attention.1} parent=1 // pred_check_branch
      %34 = sbr.rel (0) target = $region37
    $region36: #{cross_attention.1} parent=1 // pred_region
      _
    $region37: #{cross_attention.1} parent=1 // pred_fallthru
      _
    // Predicated region
    $region38: #{cross_attention.1} parent=1 // pred_check
      _
    $region39: #{cross_attention.1} parent=1 // pred_check_branch
      %36 = sbr.rel (0) target = $region41
    $region40: #{cross_attention.1} parent=1 // pred_region
      _
    $region41: #{cross_attention.1} parent=1 // pred_fallthru
      _
    // Predicated region
    $region42: #{cross_attention.1} parent=1 // pred_check
      _
    $region43: #{cross_attention.1} parent=1 // pred_check_branch
      %38 = sbr.rel (0) target = $region45
    $region44: #{cross_attention.1} parent=1 // pred_region
      _
    $region45: #{cross_attention.1} parent=1 // pred_fallthru
      _
    %v39 = vld [vmem:[%s0] sm:$0xff]
    %v40 = vld [vmem:[%s0 + $0x8] sm:$0xff]
    %v41 = vld [vmem:[%s1] sm:$0xff]
    %v42 = vld [vmem:[%s1 + $0x8] sm:$0xff]
    %v43 = vld [vmem:[%s2] sm:$0xff]
    %v44 = vld [vmem:[%s2 + $0x8] sm:$0xff]
    %v45 = vld [vmem:[%s3] sm:$0xff]
    %v46 = vld [vmem:[%s3 + $0x8] sm:$0xff]
    %v47 = vld [vmem:[%s3 + $0x10] sm:$0xff]
    %v48 = vld [vmem:[%s3 + $0x18] sm:$0xff]
    %v49 = vld [vmem:[%s4] sm:$0x1]
    %v51 = vperm.slane %v49, 0
    %vm53 = vcmask 261120
    %v55 = vsel %vm53, %v39, 0
    %v58 = vsel %vm53, %v40, 0
    %60 = vmatpush.msra.mxu0 0.0
    %61 = vmatpush.msra.mxu0 0.0
    %62 = vmatpush.msra.mxu0 0.0
    %63 = vmatpush.msra.mxu0 0.0
    %64 = vmatpush.msra.mxu0 0.0
    %65 = vmatpush.msra.mxu0 0.0
    %66 = vmatpush.msra.mxu0 0.0
    %67 = vmatpush.msra.mxu0 0.0
    %68 = vmatpush.msra.mxu0 0.0
    %69 = vmatpush.msra.mxu0 0.0
    %70 = vmatpush.msra.mxu0 0.0
    %71 = vmatpush.msra.mxu0 0.0
    %72 = vmatpush.msra.mxu0 %v48
    %73 = vmatpush.msra.mxu0 %v47
    %74 = vmatpush.msra.mxu0 %v46
    %75 = vmatpush.msra.mxu0 %v45
    %76 = vmatmul.f32.gmra.mxu0 %v55
    %v77 = vpop.f32.mrf.mxu0
    %v78 = vadd.f32 %v51, %v77
    %79 = vmatmul.f32.gmra.mxu0 %v58
    %v80 = vpop.f32.mrf.mxu0
    %v81 = vadd.f32 %v51, %v80
    %82 = vdwg.mxu0
    %v83 = vld [vmem:[%s5] sm:$0xff]
    %v84 = vld [vmem:[%s5 + $0x8] sm:$0xff]
    %v85 = vld [vmem:[%s5 + $0x10] sm:$0xff]
    %v86 = vld [vmem:[%s5 + $0x18] sm:$0xff]
    %v87 = vld [vmem:[%s6] sm:$0x1]
    %v89 = vperm.slane %v87, 0
    %v92 = vsel %vm53, %v41, 0
    %v95 = vsel %vm53, %v42, 0
    %97 = vmatpush.msra.mxu0 0.0
    %98 = vmatpush.msra.mxu0 0.0
    %99 = vmatpush.msra.mxu0 0.0
    %100 = vmatpush.msra.mxu0 0.0
    %101 = vmatpush.msra.mxu0 0.0
    %102 = vmatpush.msra.mxu0 0.0
    %103 = vmatpush.msra.mxu0 0.0
    %104 = vmatpush.msra.mxu0 0.0
    %105 = vmatpush.msra.mxu0 0.0
    %106 = vmatpush.msra.mxu0 0.0
    %107 = vmatpush.msra.mxu0 0.0
    %108 = vmatpush.msra.mxu0 0.0
    %109 = vmatpush.msra.mxu0 %v86
    %110 = vmatpush.msra.mxu0 %v85
    %111 = vmatpush.msra.mxu0 %v84
    %112 = vmatpush.msra.mxu0 %v83
    %113 = vmatmul.f32.gmra.mxu0 %v92
    %v114 = vpop.f32.mrf.mxu0
    %v115 = vadd.f32 %v89, %v114
    %116 = vmatmul.f32.gmra.mxu0 %v95
    %v117 = vpop.f32.mrf.mxu0
    %v118 = vadd.f32 %v89, %v117
    %119 = vdwg.mxu0
    %v120 = vld [vmem:[%s7] sm:$0xff]
    %v121 = vld [vmem:[%s7 + $0x8] sm:$0xff]
    %v122 = vld [vmem:[%s7 + $0x10] sm:$0xff]
    %v123 = vld [vmem:[%s7 + $0x18] sm:$0xff]
    %v124 = vld [vmem:[%s8] sm:$0x1]
    %v126 = vperm.slane %v124, 0
    %v129 = vsel %vm53, %v43, 0
    %v132 = vsel %vm53, %v44, 0
    %134 = vmatpush.msra.mxu0 0.0
    %135 = vmatpush.msra.mxu0 0.0
    %136 = vmatpush.msra.mxu0 0.0
    %137 = vmatpush.msra.mxu0 0.0
    %138 = vmatpush.msra.mxu0 0.0
    %139 = vmatpush.msra.mxu0 0.0
    %140 = vmatpush.msra.mxu0 0.0
    %141 = vmatpush.msra.mxu0 0.0
    %142 = vmatpush.msra.mxu0 0.0
    %143 = vmatpush.msra.mxu0 0.0
    %144 = vmatpush.msra.mxu0 0.0
    %145 = vmatpush.msra.mxu0 0.0
    %146 = vmatpush.msra.mxu0 %v123
    %147 = vmatpush.msra.mxu0 %v122
    %148 = vmatpush.msra.mxu0 %v121
    %149 = vmatpush.msra.mxu0 %v120
    %150 = vmatmul.f32.gmra.mxu0 %v129
    %v151 = vpop.f32.mrf.mxu0
    %v152 = vadd.f32 %v126, %v151
    %153 = vmatmul.f32.gmra.mxu0 %v132
    %v154 = vpop.f32.mrf.mxu0
    %v155 = vadd.f32 %v126, %v154
    %156 = vdwg.mxu0
    %vm157 = vcmask 64512
    %v159 = vsel %vm157, %v78, 0
    %v162 = vsel %vm157, %v115, 0
    %164 = vmatpush.xpose.msra.mxu0 0.0
    %165 = vmatpush.xpose.msra.mxu0 0.0
    %166 = vmatpush.xpose.msra.mxu0 0.0
    %167 = vmatpush.xpose.msra.mxu0 0.0
    %168 = vmatpush.xpose.msra.mxu0 0.0
    %169 = vmatpush.xpose.msra.mxu0 0.0
    %170 = vmatpush.xpose.msra.mxu0 0.0
    %171 = vmatpush.xpose.msra.mxu0 0.0
    %172 = vmatpush.xpose.msra.mxu0 0.0
    %173 = vmatpush.xpose.msra.mxu0 0.0
    %174 = vmatpush.xpose.msra.mxu0 0.0
    %175 = vmatpush.xpose.msra.mxu0 0.0
    %176 = vmatpush.xpose.msra.mxu0 0.0
    %177 = vmatpush.xpose.msra.mxu0 0.0
    %178 = vmatpush.xpose.msra.mxu0 0.0
    %179 = vmatpush.xpose.msra.mxu0 %v162
    %180 = vmatmul.f32.gmra.mxu0 %v159
    %v181 = vpop.f32.mrf.mxu0
    %v182 = vadd.f32 0.0, %v181
    %183 = vdwg.mxu0
    %v184 = vsel %vm157, %v182, -inf
    %185 = vmax.xlane.f32.xlu0 %v184
    %v186 = vpop.xlane.xlu0 %185
    %v187 = vsub.f32 %v182, %v186
    %v188 = vmul.f32 %v187, 1.442695
    %v189 = vpow.pop %v188
    %v190 = vsel %vm157, %v189, 0.0
    %191 = vadd.xlane.f32.xlu0 %v190
    %v192 = vpop.xlane.xlu0 %191
    %v193 = vrcp.pop %v192
    %v194 = vmul.f32 %v192, %v193
    %v195 = vsub.f32 1.0, %v194
    %v196 = vmul.f32 %v193, %v195
    %v197 = vadd.f32 %v193, %v196
    %vm198 = vweird.f32 %v192
    %vm199 = vweird.f32 %v193
    %vm200 = vmor %vm198, %vm199
    %v201 = vsel %vm200, %v193, %v197
    %v202 = vand.u32 2147483647, %v192
    %vm203 = vcmp.eq.f32.partialorder %v202, 8.507059e+37
    %v204 = vand.u32 %v192, 2147483648
    %v205 = vor.u32 1.1754944e-38, %v204
    %v206 = vsel %vm203, %v205, %v201
    %v207 = vmul.f32 %v189, %v206
    %v209 = vsel %vm157, %v207, 0
    %211 = vmatpush.msra.mxu0 0.0
    %212 = vmatpush.msra.mxu0 0.0
    %213 = vmatpush.msra.mxu0 0.0
    %214 = vmatpush.msra.mxu0 0.0
    %215 = vmatpush.msra.mxu0 0.0
    %216 = vmatpush.msra.mxu0 0.0
    %217 = vmatpush.msra.mxu0 0.0
    %218 = vmatpush.msra.mxu0 0.0
    %219 = vmatpush.msra.mxu0 0.0
    %220 = vmatpush.msra.mxu0 0.0
    %221 = vmatpush.msra.mxu0 0.0
    %222 = vmatpush.msra.mxu0 0.0
    %223 = vmatpush.msra.mxu0 0.0
    %224 = vmatpush.msra.mxu0 0.0
    %225 = vmatpush.msra.mxu0 0.0
    %226 = vmatpush.msra.mxu0 %v152
    %227 = vmatmul.f32.gmra.mxu0 %v209
    %v228 = vpop.f32.mrf.mxu0
    %v229 = vadd.f32 0.0, %v228
    %230 = vdwg.mxu0
    %v231 = vld [vmem:[%s9] sm:$0xff]
    %v233 = vsel %vm157, %v81, 0
    %v236 = vsel %vm157, %v118, 0
    %238 = vmatpush.xpose.msra.mxu0 0.0
    %239 = vmatpush.xpose.msra.mxu0 0.0
    %240 = vmatpush.xpose.msra.mxu0 0.0
    %241 = vmatpush.xpose.msra.mxu0 0.0
    %242 = vmatpush.xpose.msra.mxu0 0.0
    %243 = vmatpush.xpose.msra.mxu0 0.0
    %244 = vmatpush.xpose.msra.mxu0 0.0
    %245 = vmatpush.xpose.msra.mxu0 0.0
    %246 = vmatpush.xpose.msra.mxu0 0.0
    %247 = vmatpush.xpose.msra.mxu0 0.0
    %248 = vmatpush.xpose.msra.mxu0 0.0
    %249 = vmatpush.xpose.msra.mxu0 0.0
    %250 = vmatpush.xpose.msra.mxu0 0.0
    %251 = vmatpush.xpose.msra.mxu0 0.0
    %252 = vmatpush.xpose.msra.mxu0 0.0
    %253 = vmatpush.xpose.msra.mxu0 %v236
    %254 = vmatmul.f32.gmra.mxu0 %v233
    %v255 = vpop.f32.mrf.mxu0
    %v256 = vadd.f32 0.0, %v255
    %257 = vdwg.mxu0
    %v258 = vsel %vm157, %v256, -inf
    %259 = vmax.xlane.f32.xlu0 %v258
    %v260 = vpop.xlane.xlu0 %259
    %v261 = vsub.f32 %v256, %v260
    %v262 = vmul.f32 %v261, 1.442695
    %v263 = vpow.pop %v262
    %v264 = vsel %vm157, %v263, 0.0
    %265 = vadd.xlane.f32.xlu0 %v264
    %v266 = vpop.xlane.xlu0 %265
    %v267 = vrcp.pop %v266
    %v268 = vmul.f32 %v266, %v267
    %v269 = vsub.f32 1.0, %v268
    %v270 = vmul.f32 %v267, %v269
    %v271 = vadd.f32 %v267, %v270
    %vm272 = vweird.f32 %v266
    %vm273 = vweird.f32 %v267
    %vm274 = vmor %vm272, %vm273
    %v275 = vsel %vm274, %v267, %v271
    %v276 = vand.u32 2147483647, %v266
    %vm277 = vcmp.eq.f32.partialorder %v276, 8.507059e+37
    %v278 = vand.u32 %v266, 2147483648
    %v279 = vor.u32 1.1754944e-38, %v278
    %v280 = vsel %vm277, %v279, %v275
    %v281 = vmul.f32 %v263, %v280
    %v283 = vsel %vm157, %v281, 0
    %285 = vmatpush.msra.mxu0 0.0
    %286 = vmatpush.msra.mxu0 0.0
    %287 = vmatpush.msra.mxu0 0.0
    %288 = vmatpush.msra.mxu0 0.0
    %289 = vmatpush.msra.mxu0 0.0
    %290 = vmatpush.msra.mxu0 0.0
    %291 = vmatpush.msra.mxu0 0.0
    %292 = vmatpush.msra.mxu0 0.0
    %293 = vmatpush.msra.mxu0 0.0
    %294 = vmatpush.msra.mxu0 0.0
    %295 = vmatpush.msra.mxu0 0.0
    %296 = vmatpush.msra.mxu0 0.0
    %297 = vmatpush.msra.mxu0 0.0
    %298 = vmatpush.msra.mxu0 0.0
    %299 = vmatpush.msra.mxu0 0.0
    %300 = vmatpush.msra.mxu0 %v155
    %301 = vmatmul.f32.gmra.mxu0 %v283
    %v302 = vpop.f32.mrf.mxu0
    %v303 = vadd.f32 0.0, %v302
    %304 = vdwg.mxu0
    %s305 = scalar_lea.vmem %s3, 32
    %v306 = vld [vmem:[%s305] sm:$0xff]
    %v307 = vld [vmem:[%s305 + $0x8] sm:$0xff]
    %v308 = vld [vmem:[%s305 + $0x10] sm:$0xff]
    %v309 = vld [vmem:[%s305 + $0x18] sm:$0xff]
    %s310 = scalar_lea.vmem %s4, 1
    %v311 = vld [vmem:[%s310] sm:$0x1]
    %v313 = vperm.slane %v311, 0
    %315 = vmatpush.msra.mxu0 0.0
    %316 = vmatpush.msra.mxu0 0.0
    %317 = vmatpush.msra.mxu0 0.0
    %318 = vmatpush.msra.mxu0 0.0
    %319 = vmatpush.msra.mxu0 0.0
    %320 = vmatpush.msra.mxu0 0.0
    %321 = vmatpush.msra.mxu0 0.0
    %322 = vmatpush.msra.mxu0 0.0
    %323 = vmatpush.msra.mxu0 0.0
    %324 = vmatpush.msra.mxu0 0.0
    %325 = vmatpush.msra.mxu0 0.0
    %326 = vmatpush.msra.mxu0 0.0
    %327 = vmatpush.msra.mxu0 %v309
    %328 = vmatpush.msra.mxu0 %v308
    %329 = vmatpush.msra.mxu0 %v307
    %330 = vmatpush.msra.mxu0 %v306
    %331 = vmatmul.f32.gmra.mxu0 %v55
    %v332 = vpop.f32.mrf.mxu0
    %v333 = vadd.f32 %v313, %v332
    %334 = vmatmul.f32.gmra.mxu0 %v58
    %v335 = vpop.f32.mrf.mxu0
    %v336 = vadd.f32 %v313, %v335
    %337 = vdwg.mxu0
    %s338 = scalar_lea.vmem %s5, 32
    %v339 = vld [vmem:[%s338] sm:$0xff]
    %v340 = vld [vmem:[%s338 + $0x8] sm:$0xff]
    %v341 = vld [vmem:[%s338 + $0x10] sm:$0xff]
    %v342 = vld [vmem:[%s338 + $0x18] sm:$0xff]
    %s343 = scalar_lea.vmem %s6, 1
    %v344 = vld [vmem:[%s343] sm:$0x1]
    %v346 = vperm.slane %v344, 0
    %348 = vmatpush.msra.mxu0 0.0
    %349 = vmatpush.msra.mxu0 0.0
    %350 = vmatpush.msra.mxu0 0.0
    %351 = vmatpush.msra.mxu0 0.0
    %352 = vmatpush.msra.mxu0 0.0
    %353 = vmatpush.msra.mxu0 0.0
    %354 = vmatpush.msra.mxu0 0.0
    %355 = vmatpush.msra.mxu0 0.0
    %356 = vmatpush.msra.mxu0 0.0
    %357 = vmatpush.msra.mxu0 0.0
    %358 = vmatpush.msra.mxu0 0.0
    %359 = vmatpush.msra.mxu0 0.0
    %360 = vmatpush.msra.mxu0 %v342
    %361 = vmatpush.msra.mxu0 %v341
    %362 = vmatpush.msra.mxu0 %v340
    %363 = vmatpush.msra.mxu0 %v339
    %364 = vmatmul.f32.gmra.mxu0 %v92
    %v365 = vpop.f32.mrf.mxu0
    %v366 = vadd.f32 %v346, %v365
    %367 = vmatmul.f32.gmra.mxu0 %v95
    %v368 = vpop.f32.mrf.mxu0
    %v369 = vadd.f32 %v346, %v368
    %370 = vdwg.mxu0
    %s371 = scalar_lea.vmem %s7, 32
    %v372 = vld [vmem:[%s371] sm:$0xff]
    %v373 = vld [vmem:[%s371 + $0x8] sm:$0xff]
    %v374 = vld [vmem:[%s371 + $0x10] sm:$0xff]
    %v375 = vld [vmem:[%s371 + $0x18] sm:$0xff]
    %s376 = scalar_lea.vmem %s8, 1
    %v377 = vld [vmem:[%s376] sm:$0x1]
    %v379 = vperm.slane %v377, 0
    %381 = vmatpush.msra.mxu0 0.0
    %382 = vmatpush.msra.mxu0 0.0
    %383 = vmatpush.msra.mxu0 0.0
    %384 = vmatpush.msra.mxu0 0.0
    %385 = vmatpush.msra.mxu0 0.0
    %386 = vmatpush.msra.mxu0 0.0
    %387 = vmatpush.msra.mxu0 0.0
    %388 = vmatpush.msra.mxu0 0.0
    %389 = vmatpush.msra.mxu0 0.0
    %390 = vmatpush.msra.mxu0 0.0
    %391 = vmatpush.msra.mxu0 0.0
    %392 = vmatpush.msra.mxu0 0.0
    %393 = vmatpush.msra.mxu0 %v375
    %394 = vmatpush.msra.mxu0 %v374
    %395 = vmatpush.msra.mxu0 %v373
    %396 = vmatpush.msra.mxu0 %v372
    %397 = vmatmul.f32.gmra.mxu0 %v129
    %v398 = vpop.f32.mrf.mxu0
    %v399 = vadd.f32 %v379, %v398
    %400 = vmatmul.f32.gmra.mxu0 %v132
    %v401 = vpop.f32.mrf.mxu0
    %v402 = vadd.f32 %v379, %v401
    %403 = vdwg.mxu0
    %v405 = vsel %vm157, %v333, 0
    %v408 = vsel %vm157, %v366, 0
    %410 = vmatpush.xpose.msra.mxu0 0.0
    %411 = vmatpush.xpose.msra.mxu0 0.0
    %412 = vmatpush.xpose.msra.mxu0 0.0
    %413 = vmatpush.xpose.msra.mxu0 0.0
    %414 = vmatpush.xpose.msra.mxu0 0.0
    %415 = vmatpush.xpose.msra.mxu0 0.0
    %416 = vmatpush.xpose.msra.mxu0 0.0
    %417 = vmatpush.xpose.msra.mxu0 0.0
    %418 = vmatpush.xpose.msra.mxu0 0.0
    %419 = vmatpush.xpose.msra.mxu0 0.0
    %420 = vmatpush.xpose.msra.mxu0 0.0
    %421 = vmatpush.xpose.msra.mxu0 0.0
    %422 = vmatpush.xpose.msra.mxu0 0.0
    %423 = vmatpush.xpose.msra.mxu0 0.0
    %424 = vmatpush.xpose.msra.mxu0 0.0
    %425 = vmatpush.xpose.msra.mxu0 %v408
    %426 = vmatmul.f32.gmra.mxu0 %v405
    %v427 = vpop.f32.mrf.mxu0
    %v428 = vadd.f32 0.0, %v427
    %429 = vdwg.mxu0
    %v430 = vsel %vm157, %v428, -inf
    %431 = vmax.xlane.f32.xlu0 %v430
    %v432 = vpop.xlane.xlu0 %431
    %v433 = vsub.f32 %v428, %v432
    %v434 = vmul.f32 %v433, 1.442695
    %v435 = vpow.pop %v434
    %v436 = vsel %vm157, %v435, 0.0
    %437 = vadd.xlane.f32.xlu0 %v436
    %v438 = vpop.xlane.xlu0 %437
    %v439 = vrcp.pop %v438
    %v440 = vmul.f32 %v438, %v439
    %v441 = vsub.f32 1.0, %v440
    %v442 = vmul.f32 %v439, %v441
    %v443 = vadd.f32 %v439, %v442
    %vm444 = vweird.f32 %v438
    %vm445 = vweird.f32 %v439
    %vm446 = vmor %vm444, %vm445
    %v447 = vsel %vm446, %v439, %v443
    %v448 = vand.u32 2147483647, %v438
    %vm449 = vcmp.eq.f32.partialorder %v448, 8.507059e+37
    %v450 = vand.u32 %v438, 2147483648
    %v451 = vor.u32 1.1754944e-38, %v450
    %v452 = vsel %vm449, %v451, %v447
    %v453 = vmul.f32 %v435, %v452
    %v455 = vsel %vm157, %v453, 0
    %457 = vmatpush.msra.mxu0 0.0
    %458 = vmatpush.msra.mxu0 0.0
    %459 = vmatpush.msra.mxu0 0.0
    %460 = vmatpush.msra.mxu0 0.0
    %461 = vmatpush.msra.mxu0 0.0
    %462 = vmatpush.msra.mxu0 0.0
    %463 = vmatpush.msra.mxu0 0.0
    %464 = vmatpush.msra.mxu0 0.0
    %465 = vmatpush.msra.mxu0 0.0
    %466 = vmatpush.msra.mxu0 0.0
    %467 = vmatpush.msra.mxu0 0.0
    %468 = vmatpush.msra.mxu0 0.0
    %469 = vmatpush.msra.mxu0 0.0
    %470 = vmatpush.msra.mxu0 0.0
    %471 = vmatpush.msra.mxu0 0.0
    %472 = vmatpush.msra.mxu0 %v399
    %473 = vmatmul.f32.gmra.mxu0 %v455
    %v474 = vpop.f32.mrf.mxu0
    %v475 = vadd.f32 0.0, %v474
    %476 = vdwg.mxu0
    %s477 = scalar_lea.vmem %s9, 8
    %v478 = vld [vmem:[%s477] sm:$0xff]
    %v480 = vsel %vm157, %v475, 0
    %482 = vmatpush.msra.mxu0 0.0
    %483 = vmatpush.msra.mxu0 0.0
    %484 = vmatpush.msra.mxu0 0.0
    %485 = vmatpush.msra.mxu0 0.0
    %486 = vmatpush.msra.mxu0 0.0
    %487 = vmatpush.msra.mxu0 0.0
    %488 = vmatpush.msra.mxu0 0.0
    %489 = vmatpush.msra.mxu0 0.0
    %490 = vmatpush.msra.mxu0 0.0
    %491 = vmatpush.msra.mxu0 0.0
    %492 = vmatpush.msra.mxu0 0.0
    %493 = vmatpush.msra.mxu0 0.0
    %494 = vmatpush.msra.mxu0 0.0
    %495 = vmatpush.msra.mxu0 0.0
    %496 = vmatpush.msra.mxu0 0.0
    %497 = vmatpush.msra.mxu0 %v478
    %498 = vmatmul.f32.gmra.mxu0 %v480
    %v499 = vpop.f32.mrf.mxu0
    %v500 = vadd.f32 0.0, %v499
    %501 = vdwg.mxu0
    %v503 = vsel %vm157, %v229, 0
    %505 = vmatpush.msra.mxu0 0.0
    %506 = vmatpush.msra.mxu0 0.0
    %507 = vmatpush.msra.mxu0 0.0
    %508 = vmatpush.msra.mxu0 0.0
    %509 = vmatpush.msra.mxu0 0.0
    %510 = vmatpush.msra.mxu0 0.0
    %511 = vmatpush.msra.mxu0 0.0
    %512 = vmatpush.msra.mxu0 0.0
    %513 = vmatpush.msra.mxu0 0.0
    %514 = vmatpush.msra.mxu0 0.0
    %515 = vmatpush.msra.mxu0 0.0
    %516 = vmatpush.msra.mxu0 0.0
    %517 = vmatpush.msra.mxu0 0.0
    %518 = vmatpush.msra.mxu0 0.0
    %519 = vmatpush.msra.mxu0 0.0
    %520 = vmatpush.msra.mxu0 %v231
    %521 = vmatmul.f32.gmra.mxu0 %v503
    %v522 = vpop.f32.mrf.mxu0
    %v523 = vadd.f32 %v500, %v522
    %524 = vdwg.mxu0
    %v526 = vsel %vm157, %v336, 0
    %v529 = vsel %vm157, %v369, 0
    %531 = vmatpush.xpose.msra.mxu0 0.0
    %532 = vmatpush.xpose.msra.mxu0 0.0
    %533 = vmatpush.xpose.msra.mxu0 0.0
    %534 = vmatpush.xpose.msra.mxu0 0.0
    %535 = vmatpush.xpose.msra.mxu0 0.0
    %536 = vmatpush.xpose.msra.mxu0 0.0
    %537 = vmatpush.xpose.msra.mxu0 0.0
    %538 = vmatpush.xpose.msra.mxu0 0.0
    %539 = vmatpush.xpose.msra.mxu0 0.0
    %540 = vmatpush.xpose.msra.mxu0 0.0
    %541 = vmatpush.xpose.msra.mxu0 0.0
    %542 = vmatpush.xpose.msra.mxu0 0.0
    %543 = vmatpush.xpose.msra.mxu0 0.0
    %544 = vmatpush.xpose.msra.mxu0 0.0
    %545 = vmatpush.xpose.msra.mxu0 0.0
    %546 = vmatpush.xpose.msra.mxu0 %v529
    %547 = vmatmul.f32.gmra.mxu0 %v526
    %v548 = vpop.f32.mrf.mxu0
    %v549 = vadd.f32 0.0, %v548
    %550 = vdwg.mxu0
    %v551 = vsel %vm157, %v549, -inf
    %552 = vmax.xlane.f32.xlu0 %v551
    %v553 = vpop.xlane.xlu0 %552
    %v554 = vsub.f32 %v549, %v553
    %v555 = vmul.f32 %v554, 1.442695
    %v556 = vpow.pop %v555
    %v557 = vsel %vm157, %v556, 0.0
    %558 = vadd.xlane.f32.xlu0 %v557
    %v559 = vpop.xlane.xlu0 %558
    %v560 = vrcp.pop %v559
    %v561 = vmul.f32 %v559, %v560
    %v562 = vsub.f32 1.0, %v561
    %v563 = vmul.f32 %v560, %v562
    %v564 = vadd.f32 %v560, %v563
    %vm565 = vweird.f32 %v559
    %vm566 = vweird.f32 %v560
    %vm567 = vmor %vm565, %vm566
    %v568 = vsel %vm567, %v560, %v564
    %v569 = vand.u32 2147483647, %v559
    %vm570 = vcmp.eq.f32.partialorder %v569, 8.507059e+37
    %v571 = vand.u32 %v559, 2147483648
    %v572 = vor.u32 1.1754944e-38, %v571
    %v573 = vsel %vm570, %v572, %v568
    %v574 = vmul.f32 %v556, %v573
    %v576 = vsel %vm157, %v574, 0
    %578 = vmatpush.msra.mxu0 0.0
    %579 = vmatpush.msra.mxu0 0.0
    %580 = vmatpush.msra.mxu0 0.0
    %581 = vmatpush.msra.mxu0 0.0
    %582 = vmatpush.msra.mxu0 0.0
    %583 = vmatpush.msra.mxu0 0.0
    %584 = vmatpush.msra.mxu0 0.0
    %585 = vmatpush.msra.mxu0 0.0
    %586 = vmatpush.msra.mxu0 0.0
    %587 = vmatpush.msra.mxu0 0.0
    %588 = vmatpush.msra.mxu0 0.0
    %589 = vmatpush.msra.mxu0 0.0
    %590 = vmatpush.msra.mxu0 0.0
    %591 = vmatpush.msra.mxu0 0.0
    %592 = vmatpush.msra.mxu0 0.0
    %593 = vmatpush.msra.mxu0 %v402
    %594 = vmatmul.f32.gmra.mxu0 %v576
    %v595 = vpop.f32.mrf.mxu0
    %v596 = vadd.f32 0.0, %v595
    %597 = vdwg.mxu0
    %v599 = vsel %vm157, %v596, 0
    %601 = vmatpush.msra.mxu0 0.0
    %602 = vmatpush.msra.mxu0 0.0
    %603 = vmatpush.msra.mxu0 0.0
    %604 = vmatpush.msra.mxu0 0.0
    %605 = vmatpush.msra.mxu0 0.0
    %606 = vmatpush.msra.mxu0 0.0
    %607 = vmatpush.msra.mxu0 0.0
    %608 = vmatpush.msra.mxu0 0.0
    %609 = vmatpush.msra.mxu0 0.0
    %610 = vmatpush.msra.mxu0 0.0
    %611 = vmatpush.msra.mxu0 0.0
    %612 = vmatpush.msra.mxu0 0.0
    %613 = vmatpush.msra.mxu0 0.0
    %614 = vmatpush.msra.mxu0 0.0
    %615 = vmatpush.msra.mxu0 0.0
    %616 = vmatpush.msra.mxu0 %v478
    %617 = vmatmul.f32.gmra.mxu0 %v599
    %v618 = vpop.f32.mrf.mxu0
    %v619 = vadd.f32 0.0, %v618
    %620 = vdwg.mxu0
    %v622 = vsel %vm157, %v303, 0
    %624 = vmatpush.msra.mxu0 0.0
    %625 = vmatpush.msra.mxu0 0.0
    %626 = vmatpush.msra.mxu0 0.0
    %627 = vmatpush.msra.mxu0 0.0
    %628 = vmatpush.msra.mxu0 0.0
    %629 = vmatpush.msra.mxu0 0.0
    %630 = vmatpush.msra.mxu0 0.0
    %631 = vmatpush.msra.mxu0 0.0
    %632 = vmatpush.msra.mxu0 0.0
    %633 = vmatpush.msra.mxu0 0.0
    %634 = vmatpush.msra.mxu0 0.0
    %635 = vmatpush.msra.mxu0 0.0
    %636 = vmatpush.msra.mxu0 0.0
    %637 = vmatpush.msra.mxu0 0.0
    %638 = vmatpush.msra.mxu0 0.0
    %639 = vmatpush.msra.mxu0 %v231
    %640 = vmatmul.f32.gmra.mxu0 %v622
    %v641 = vpop.f32.mrf.mxu0
    %v642 = vadd.f32 %v619, %v641
    %643 = vdwg.mxu0
    %s644 = scalar_lea.vmem %s3, 64
    %v645 = vld [vmem:[%s644] sm:$0xff]
    %v646 = vld [vmem:[%s644 + $0x8] sm:$0xff]
    %v647 = vld [vmem:[%s644 + $0x10] sm:$0xff]
    %v648 = vld [vmem:[%s644 + $0x18] sm:$0xff]
    %s649 = scalar_lea.vmem %s4, 2
    %v650 = vld [vmem:[%s649] sm:$0x1]
    %v652 = vperm.slane %v650, 0
    %654 = vmatpush.msra.mxu0 0.0
    %655 = vmatpush.msra.mxu0 0.0
    %656 = vmatpush.msra.mxu0 0.0
    %657 = vmatpush.msra.mxu0 0.0
    %658 = vmatpush.msra.mxu0 0.0
    %659 = vmatpush.msra.mxu0 0.0
    %660 = vmatpush.msra.mxu0 0.0
    %661 = vmatpush.msra.mxu0 0.0
    %662 = vmatpush.msra.mxu0 0.0
    %663 = vmatpush.msra.mxu0 0.0
    %664 = vmatpush.msra.mxu0 0.0
    %665 = vmatpush.msra.mxu0 0.0
    %666 = vmatpush.msra.mxu0 %v648
    %667 = vmatpush.msra.mxu0 %v647
    %668 = vmatpush.msra.mxu0 %v646
    %669 = vmatpush.msra.mxu0 %v645
    %670 = vmatmul.f32.gmra.mxu0 %v55
    %v671 = vpop.f32.mrf.mxu0
    %v672 = vadd.f32 %v652, %v671
    %673 = vmatmul.f32.gmra.mxu0 %v58
    %v674 = vpop.f32.mrf.mxu0
    %v675 = vadd.f32 %v652, %v674
    %676 = vdwg.mxu0
    %s677 = scalar_lea.vmem %s5, 64
    %v678 = vld [vmem:[%s677] sm:$0xff]
    %v679 = vld [vmem:[%s677 + $0x8] sm:$0xff]
    %v680 = vld [vmem:[%s677 + $0x10] sm:$0xff]
    %v681 = vld [vmem:[%s677 + $0x18] sm:$0xff]
    %s682 = scalar_lea.vmem %s6, 2
    %v683 = vld [vmem:[%s682] sm:$0x1]
    %v685 = vperm.slane %v683, 0
    %687 = vmatpush.msra.mxu0 0.0
    %688 = vmatpush.msra.mxu0 0.0
    %689 = vmatpush.msra.mxu0 0.0
    %690 = vmatpush.msra.mxu0 0.0
    %691 = vmatpush.msra.mxu0 0.0
    %692 = vmatpush.msra.mxu0 0.0
    %693 = vmatpush.msra.mxu0 0.0
    %694 = vmatpush.msra.mxu0 0.0
    %695 = vmatpush.msra.mxu0 0.0
    %696 = vmatpush.msra.mxu0 0.0
    %697 = vmatpush.msra.mxu0 0.0
    %698 = vmatpush.msra.mxu0 0.0
    %699 = vmatpush.msra.mxu0 %v681
    %700 = vmatpush.msra.mxu0 %v680
    %701 = vmatpush.msra.mxu0 %v679
    %702 = vmatpush.msra.mxu0 %v678
    %703 = vmatmul.f32.gmra.mxu0 %v92
    %v704 = vpop.f32.mrf.mxu0
    %v705 = vadd.f32 %v685, %v704
    %706 = vmatmul.f32.gmra.mxu0 %v95
    %v707 = vpop.f32.mrf.mxu0
    %v708 = vadd.f32 %v685, %v707
    %709 = vdwg.mxu0
    %s710 = scalar_lea.vmem %s7, 64
    %v711 = vld [vmem:[%s710] sm:$0xff]
    %v712 = vld [vmem:[%s710 + $0x8] sm:$0xff]
    %v713 = vld [vmem:[%s710 + $0x10] sm:$0xff]
    %v714 = vld [vmem:[%s710 + $0x18] sm:$0xff]
    %s715 = scalar_lea.vmem %s8, 2
    %v716 = vld [vmem:[%s715] sm:$0x1]
    %v718 = vperm.slane %v716, 0
    %720 = vmatpush.msra.mxu0 0.0
    %721 = vmatpush.msra.mxu0 0.0
    %722 = vmatpush.msra.mxu0 0.0
    %723 = vmatpush.msra.mxu0 0.0
    %724 = vmatpush.msra.mxu0 0.0
    %725 = vmatpush.msra.mxu0 0.0
    %726 = vmatpush.msra.mxu0 0.0
    %727 = vmatpush.msra.mxu0 0.0
    %728 = vmatpush.msra.mxu0 0.0
    %729 = vmatpush.msra.mxu0 0.0
    %730 = vmatpush.msra.mxu0 0.0
    %731 = vmatpush.msra.mxu0 0.0
    %732 = vmatpush.msra.mxu0 %v714
    %733 = vmatpush.msra.mxu0 %v713
    %734 = vmatpush.msra.mxu0 %v712
    %735 = vmatpush.msra.mxu0 %v711
    %736 = vmatmul.f32.gmra.mxu0 %v129
    %v737 = vpop.f32.mrf.mxu0
    %v738 = vadd.f32 %v718, %v737
    %739 = vmatmul.f32.gmra.mxu0 %v132
    %v740 = vpop.f32.mrf.mxu0
    %v741 = vadd.f32 %v718, %v740
    %742 = vdwg.mxu0
    %v744 = vsel %vm157, %v672, 0
    %v747 = vsel %vm157, %v705, 0
    %749 = vmatpush.xpose.msra.mxu0 0.0
    %750 = vmatpush.xpose.msra.mxu0 0.0
    %751 = vmatpush.xpose.msra.mxu0 0.0
    %752 = vmatpush.xpose.msra.mxu0 0.0
    %753 = vmatpush.xpose.msra.mxu0 0.0
    %754 = vmatpush.xpose.msra.mxu0 0.0
    %755 = vmatpush.xpose.msra.mxu0 0.0
    %756 = vmatpush.xpose.msra.mxu0 0.0
    %757 = vmatpush.xpose.msra.mxu0 0.0
    %758 = vmatpush.xpose.msra.mxu0 0.0
    %759 = vmatpush.xpose.msra.mxu0 0.0
    %760 = vmatpush.xpose.msra.mxu0 0.0
    %761 = vmatpush.xpose.msra.mxu0 0.0
    %762 = vmatpush.xpose.msra.mxu0 0.0
    %763 = vmatpush.xpose.msra.mxu0 0.0
    %764 = vmatpush.xpose.msra.mxu0 %v747
    %765 = vmatmul.f32.gmra.mxu0 %v744
    %v766 = vpop.f32.mrf.mxu0
    %v767 = vadd.f32 0.0, %v766
    %768 = vdwg.mxu0
    %v769 = vsel %vm157, %v767, -inf
    %770 = vmax.xlane.f32.xlu0 %v769
    %v771 = vpop.xlane.xlu0 %770
    %v772 = vsub.f32 %v767, %v771
    %v773 = vmul.f32 %v772, 1.442695
    %v774 = vpow.pop %v773
    %v775 = vsel %vm157, %v774, 0.0
    %776 = vadd.xlane.f32.xlu0 %v775
    %v777 = vpop.xlane.xlu0 %776
    %v778 = vrcp.pop %v777
    %v779 = vmul.f32 %v777, %v778
    %v780 = vsub.f32 1.0, %v779
    %v781 = vmul.f32 %v778, %v780
    %v782 = vadd.f32 %v778, %v781
    %vm783 = vweird.f32 %v777
    %vm784 = vweird.f32 %v778
    %vm785 = vmor %vm783, %vm784
    %v786 = vsel %vm785, %v778, %v782
    %v787 = vand.u32 2147483647, %v777
    %vm788 = vcmp.eq.f32.partialorder %v787, 8.507059e+37
    %v789 = vand.u32 %v777, 2147483648
    %v790 = vor.u32 1.1754944e-38, %v789
    %v791 = vsel %vm788, %v790, %v786
    %v792 = vmul.f32 %v774, %v791
    %v794 = vsel %vm157, %v792, 0
    %796 = vmatpush.msra.mxu0 0.0
    %797 = vmatpush.msra.mxu0 0.0
    %798 = vmatpush.msra.mxu0 0.0
    %799 = vmatpush.msra.mxu0 0.0
    %800 = vmatpush.msra.mxu0 0.0
    %801 = vmatpush.msra.mxu0 0.0
    %802 = vmatpush.msra.mxu0 0.0
    %803 = vmatpush.msra.mxu0 0.0
    %804 = vmatpush.msra.mxu0 0.0
    %805 = vmatpush.msra.mxu0 0.0
    %806 = vmatpush.msra.mxu0 0.0
    %807 = vmatpush.msra.mxu0 0.0
    %808 = vmatpush.msra.mxu0 0.0
    %809 = vmatpush.msra.mxu0 0.0
    %810 = vmatpush.msra.mxu0 0.0
    %811 = vmatpush.msra.mxu0 %v738
    %812 = vmatmul.f32.gmra.mxu0 %v794
    %v813 = vpop.f32.mrf.mxu0
    %v814 = vadd.f32 0.0, %v813
    %815 = vdwg.mxu0
    %s816 = scalar_lea.vmem %s9, 16
    %v817 = vld [vmem:[%s816] sm:$0xff]
    %v819 = vsel %vm157, %v814, 0
    %821 = vmatpush.msra.mxu0 0.0
    %822 = vmatpush.msra.mxu0 0.0
    %823 = vmatpush.msra.mxu0 0.0
    %824 = vmatpush.msra.mxu0 0.0
    %825 = vmatpush.msra.mxu0 0.0
    %826 = vmatpush.msra.mxu0 0.0
    %827 = vmatpush.msra.mxu0 0.0
    %828 = vmatpush.msra.mxu0 0.0
    %829 = vmatpush.msra.mxu0 0.0
    %830 = vmatpush.msra.mxu0 0.0
    %831 = vmatpush.msra.mxu0 0.0
    %832 = vmatpush.msra.mxu0 0.0
    %833 = vmatpush.msra.mxu0 0.0
    %834 = vmatpush.msra.mxu0 0.0
    %835 = vmatpush.msra.mxu0 0.0
    %836 = vmatpush.msra.mxu0 %v817
    %837 = vmatmul.f32.gmra.mxu0 %v819
    %v838 = vpop.f32.mrf.mxu0
    %v839 = vadd.f32 0.0, %v838
    %840 = vdwg.mxu0
    %v841 = vadd.f32 %v523, %v839
    %v843 = vsel %vm157, %v675, 0
    %v846 = vsel %vm157, %v708, 0
    %848 = vmatpush.xpose.msra.mxu0 0.0
    %849 = vmatpush.xpose.msra.mxu0 0.0
    %850 = vmatpush.xpose.msra.mxu0 0.0
    %851 = vmatpush.xpose.msra.mxu0 0.0
    %852 = vmatpush.xpose.msra.mxu0 0.0
    %853 = vmatpush.xpose.msra.mxu0 0.0
    %854 = vmatpush.xpose.msra.mxu0 0.0
    %855 = vmatpush.xpose.msra.mxu0 0.0
    %856 = vmatpush.xpose.msra.mxu0 0.0
    %857 = vmatpush.xpose.msra.mxu0 0.0
    %858 = vmatpush.xpose.msra.mxu0 0.0
    %859 = vmatpush.xpose.msra.mxu0 0.0
    %860 = vmatpush.xpose.msra.mxu0 0.0
    %861 = vmatpush.xpose.msra.mxu0 0.0
    %862 = vmatpush.xpose.msra.mxu0 0.0
    %863 = vmatpush.xpose.msra.mxu0 %v846
    %864 = vmatmul.f32.gmra.mxu0 %v843
    %v865 = vpop.f32.mrf.mxu0
    %v866 = vadd.f32 0.0, %v865
    %867 = vdwg.mxu0
    %v868 = vsel %vm157, %v866, -inf
    %869 = vmax.xlane.f32.xlu0 %v868
    %v870 = vpop.xlane.xlu0 %869
    %v871 = vsub.f32 %v866, %v870
    %v872 = vmul.f32 %v871, 1.442695
    %v873 = vpow.pop %v872
    %v874 = vsel %vm157, %v873, 0.0
    %875 = vadd.xlane.f32.xlu0 %v874
    %v876 = vpop.xlane.xlu0 %875
    %v877 = vrcp.pop %v876
    %v878 = vmul.f32 %v876, %v877
    %v879 = vsub.f32 1.0, %v878
    %v880 = vmul.f32 %v877, %v879
    %v881 = vadd.f32 %v877, %v880
    %vm882 = vweird.f32 %v876
    %vm883 = vweird.f32 %v877
    %vm884 = vmor %vm882, %vm883
    %v885 = vsel %vm884, %v877, %v881
    %v886 = vand.u32 2147483647, %v876
    %vm887 = vcmp.eq.f32.partialorder %v886, 8.507059e+37
    %v888 = vand.u32 %v876, 2147483648
    %v889 = vor.u32 1.1754944e-38, %v888
    %v890 = vsel %vm887, %v889, %v885
    %v891 = vmul.f32 %v873, %v890
    %v893 = vsel %vm157, %v891, 0
    %895 = vmatpush.msra.mxu0 0.0
    %896 = vmatpush.msra.mxu0 0.0
    %897 = vmatpush.msra.mxu0 0.0
    %898 = vmatpush.msra.mxu0 0.0
    %899 = vmatpush.msra.mxu0 0.0
    %900 = vmatpush.msra.mxu0 0.0
    %901 = vmatpush.msra.mxu0 0.0
    %902 = vmatpush.msra.mxu0 0.0
    %903 = vmatpush.msra.mxu0 0.0
    %904 = vmatpush.msra.mxu0 0.0
    %905 = vmatpush.msra.mxu0 0.0
    %906 = vmatpush.msra.mxu0 0.0
    %907 = vmatpush.msra.mxu0 0.0
    %908 = vmatpush.msra.mxu0 0.0
    %909 = vmatpush.msra.mxu0 0.0
    %910 = vmatpush.msra.mxu0 %v741
    %911 = vmatmul.f32.gmra.mxu0 %v893
    %v912 = vpop.f32.mrf.mxu0
    %v913 = vadd.f32 0.0, %v912
    %914 = vdwg.mxu0
    %v916 = vsel %vm157, %v913, 0
    %918 = vmatpush.msra.mxu0 0.0
    %919 = vmatpush.msra.mxu0 0.0
    %920 = vmatpush.msra.mxu0 0.0
    %921 = vmatpush.msra.mxu0 0.0
    %922 = vmatpush.msra.mxu0 0.0
    %923 = vmatpush.msra.mxu0 0.0
    %924 = vmatpush.msra.mxu0 0.0
    %925 = vmatpush.msra.mxu0 0.0
    %926 = vmatpush.msra.mxu0 0.0
    %927 = vmatpush.msra.mxu0 0.0
    %928 = vmatpush.msra.mxu0 0.0
    %929 = vmatpush.msra.mxu0 0.0
    %930 = vmatpush.msra.mxu0 0.0
    %931 = vmatpush.msra.mxu0 0.0
    %932 = vmatpush.msra.mxu0 0.0
    %933 = vmatpush.msra.mxu0 %v817
    %934 = vmatmul.f32.gmra.mxu0 %v916
    %v935 = vpop.f32.mrf.mxu0
    %v936 = vadd.f32 0.0, %v935
    %937 = vdwg.mxu0
    %v938 = vadd.f32 %v642, %v936
    %s939 = scalar_lea.vmem %s3, 96
    %v940 = vld [vmem:[%s939] sm:$0xff]
    %v941 = vld [vmem:[%s939 + $0x8] sm:$0xff]
    %v942 = vld [vmem:[%s939 + $0x10] sm:$0xff]
    %v943 = vld [vmem:[%s939 + $0x18] sm:$0xff]
    %s944 = scalar_lea.vmem %s4, 3
    %v945 = vld [vmem:[%s944] sm:$0x1]
    %v947 = vperm.slane %v945, 0
    %949 = vmatpush.msra.mxu0 0.0
    %950 = vmatpush.msra.mxu0 0.0
    %951 = vmatpush.msra.mxu0 0.0
    %952 = vmatpush.msra.mxu0 0.0
    %953 = vmatpush.msra.mxu0 0.0
    %954 = vmatpush.msra.mxu0 0.0
    %955 = vmatpush.msra.mxu0 0.0
    %956 = vmatpush.msra.mxu0 0.0
    %957 = vmatpush.msra.mxu0 0.0
    %958 = vmatpush.msra.mxu0 0.0
    %959 = vmatpush.msra.mxu0 0.0
    %960 = vmatpush.msra.mxu0 0.0
    %961 = vmatpush.msra.mxu0 %v943
    %962 = vmatpush.msra.mxu0 %v942
    %963 = vmatpush.msra.mxu0 %v941
    %964 = vmatpush.msra.mxu0 %v940
    %965 = vmatmul.f32.gmra.mxu0 %v55
    %v966 = vpop.f32.mrf.mxu0
    %v967 = vadd.f32 %v947, %v966
    %968 = vmatmul.f32.gmra.mxu0 %v58
    %v969 = vpop.f32.mrf.mxu0
    %v970 = vadd.f32 %v947, %v969
    %971 = vdwg.mxu0
    %s972 = scalar_lea.vmem %s5, 96
    %v973 = vld [vmem:[%s972] sm:$0xff]
    %v974 = vld [vmem:[%s972 + $0x8] sm:$0xff]
    %v975 = vld [vmem:[%s972 + $0x10] sm:$0xff]
    %v976 = vld [vmem:[%s972 + $0x18] sm:$0xff]
    %s977 = scalar_lea.vmem %s6, 3
    %v978 = vld [vmem:[%s977] sm:$0x1]
    %v980 = vperm.slane %v978, 0
    %982 = vmatpush.msra.mxu0 0.0
    %983 = vmatpush.msra.mxu0 0.0
    %984 = vmatpush.msra.mxu0 0.0
    %985 = vmatpush.msra.mxu0 0.0
    %986 = vmatpush.msra.mxu0 0.0
    %987 = vmatpush.msra.mxu0 0.0
    %988 = vmatpush.msra.mxu0 0.0
    %989 = vmatpush.msra.mxu0 0.0
    %990 = vmatpush.msra.mxu0 0.0
    %991 = vmatpush.msra.mxu0 0.0
    %992 = vmatpush.msra.mxu0 0.0
    %993 = vmatpush.msra.mxu0 0.0
    %994 = vmatpush.msra.mxu0 %v976
    %995 = vmatpush.msra.mxu0 %v975
    %996 = vmatpush.msra.mxu0 %v974
    %997 = vmatpush.msra.mxu0 %v973
    %998 = vmatmul.f32.gmra.mxu0 %v92
    %v999 = vpop.f32.mrf.mxu0
    %v1000 = vadd.f32 %v980, %v999
    %1001 = vmatmul.f32.gmra.mxu0 %v95
    %v1002 = vpop.f32.mrf.mxu0
    %v1003 = vadd.f32 %v980, %v1002
    %1004 = vdwg.mxu0
    %s1005 = scalar_lea.vmem %s7, 96
    %v1006 = vld [vmem:[%s1005] sm:$0xff]
    %v1007 = vld [vmem:[%s1005 + $0x8] sm:$0xff]
    %v1008 = vld [vmem:[%s1005 + $0x10] sm:$0xff]
    %v1009 = vld [vmem:[%s1005 + $0x18] sm:$0xff]
    %s1010 = scalar_lea.vmem %s8, 3
    %v1011 = vld [vmem:[%s1010] sm:$0x1]
    %v1013 = vperm.slane %v1011, 0
    %1015 = vmatpush.msra.mxu0 0.0
    %1016 = vmatpush.msra.mxu0 0.0
    %1017 = vmatpush.msra.mxu0 0.0
    %1018 = vmatpush.msra.mxu0 0.0
    %1019 = vmatpush.msra.mxu0 0.0
    %1020 = vmatpush.msra.mxu0 0.0
    %1021 = vmatpush.msra.mxu0 0.0
    %1022 = vmatpush.msra.mxu0 0.0
    %1023 = vmatpush.msra.mxu0 0.0
    %1024 = vmatpush.msra.mxu0 0.0
    %1025 = vmatpush.msra.mxu0 0.0
    %1026 = vmatpush.msra.mxu0 0.0
    %1027 = vmatpush.msra.mxu0 %v1009
    %1028 = vmatpush.msra.mxu0 %v1008
    %1029 = vmatpush.msra.mxu0 %v1007
    %1030 = vmatpush.msra.mxu0 %v1006
    %1031 = vmatmul.f32.gmra.mxu0 %v129
    %v1032 = vpop.f32.mrf.mxu0
    %v1033 = vadd.f32 %v1013, %v1032
    %1034 = vmatmul.f32.gmra.mxu0 %v132
    %v1035 = vpop.f32.mrf.mxu0
    %v1036 = vadd.f32 %v1013, %v1035
    %1037 = vdwg.mxu0
    %v1039 = vsel %vm157, %v967, 0
    %v1042 = vsel %vm157, %v1000, 0
    %1044 = vmatpush.xpose.msra.mxu0 0.0
    %1045 = vmatpush.xpose.msra.mxu0 0.0
    %1046 = vmatpush.xpose.msra.mxu0 0.0
    %1047 = vmatpush.xpose.msra.mxu0 0.0
    %1048 = vmatpush.xpose.msra.mxu0 0.0
    %1049 = vmatpush.xpose.msra.mxu0 0.0
    %1050 = vmatpush.xpose.msra.mxu0 0.0
    %1051 = vmatpush.xpose.msra.mxu0 0.0
    %1052 = vmatpush.xpose.msra.mxu0 0.0
    %1053 = vmatpush.xpose.msra.mxu0 0.0
    %1054 = vmatpush.xpose.msra.mxu0 0.0
    %1055 = vmatpush.xpose.msra.mxu0 0.0
    %1056 = vmatpush.xpose.msra.mxu0 0.0
    %1057 = vmatpush.xpose.msra.mxu0 0.0
    %1058 = vmatpush.xpose.msra.mxu0 0.0
    %1059 = vmatpush.xpose.msra.mxu0 %v1042
    %1060 = vmatmul.f32.gmra.mxu0 %v1039
    %v1061 = vpop.f32.mrf.mxu0
    %v1062 = vadd.f32 0.0, %v1061
    %1063 = vdwg.mxu0
    %v1064 = vsel %vm157, %v1062, -inf
    %1065 = vmax.xlane.f32.xlu0 %v1064
    %v1066 = vpop.xlane.xlu0 %1065
    %v1067 = vsub.f32 %v1062, %v1066
    %v1068 = vmul.f32 %v1067, 1.442695
    %v1069 = vpow.pop %v1068
    %v1070 = vsel %vm157, %v1069, 0.0
    %1071 = vadd.xlane.f32.xlu0 %v1070
    %v1072 = vpop.xlane.xlu0 %1071
    %v1073 = vrcp.pop %v1072
    %v1074 = vmul.f32 %v1072, %v1073
    %v1075 = vsub.f32 1.0, %v1074
    %v1076 = vmul.f32 %v1073, %v1075
    %v1077 = vadd.f32 %v1073, %v1076
    %vm1078 = vweird.f32 %v1072
    %vm1079 = vweird.f32 %v1073
    %vm1080 = vmor %vm1078, %vm1079
    %v1081 = vsel %vm1080, %v1073, %v1077
    %v1082 = vand.u32 2147483647, %v1072
    %vm1083 = vcmp.eq.f32.partialorder %v1082, 8.507059e+37
    %v1084 = vand.u32 %v1072, 2147483648
    %v1085 = vor.u32 1.1754944e-38, %v1084
    %v1086 = vsel %vm1083, %v1085, %v1081
    %v1087 = vmul.f32 %v1069, %v1086
    %v1089 = vsel %vm157, %v1087, 0
    %1091 = vmatpush.msra.mxu0 0.0
    %1092 = vmatpush.msra.mxu0 0.0
    %1093 = vmatpush.msra.mxu0 0.0
    %1094 = vmatpush.msra.mxu0 0.0
    %1095 = vmatpush.msra.mxu0 0.0
    %1096 = vmatpush.msra.mxu0 0.0
    %1097 = vmatpush.msra.mxu0 0.0
    %1098 = vmatpush.msra.mxu0 0.0
    %1099 = vmatpush.msra.mxu0 0.0
    %1100 = vmatpush.msra.mxu0 0.0
    %1101 = vmatpush.msra.mxu0 0.0
    %1102 = vmatpush.msra.mxu0 0.0
    %1103 = vmatpush.msra.mxu0 0.0
    %1104 = vmatpush.msra.mxu0 0.0
    %1105 = vmatpush.msra.mxu0 0.0
    %1106 = vmatpush.msra.mxu0 %v1033
    %1107 = vmatmul.f32.gmra.mxu0 %v1089
    %v1108 = vpop.f32.mrf.mxu0
    %v1109 = vadd.f32 0.0, %v1108
    %1110 = vdwg.mxu0
    %s1111 = scalar_lea.vmem %s9, 24
    %v1112 = vld [vmem:[%s1111] sm:$0xff]
    %v1114 = vsel %vm157, %v1109, 0
    %1116 = vmatpush.msra.mxu0 0.0
    %1117 = vmatpush.msra.mxu0 0.0
    %1118 = vmatpush.msra.mxu0 0.0
    %1119 = vmatpush.msra.mxu0 0.0
    %1120 = vmatpush.msra.mxu0 0.0
    %1121 = vmatpush.msra.mxu0 0.0
    %1122 = vmatpush.msra.mxu0 0.0
    %1123 = vmatpush.msra.mxu0 0.0
    %1124 = vmatpush.msra.mxu0 0.0
    %1125 = vmatpush.msra.mxu0 0.0
    %1126 = vmatpush.msra.mxu0 0.0
    %1127 = vmatpush.msra.mxu0 0.0
    %1128 = vmatpush.msra.mxu0 0.0
    %1129 = vmatpush.msra.mxu0 0.0
    %1130 = vmatpush.msra.mxu0 0.0
    %1131 = vmatpush.msra.mxu0 %v1112
    %1132 = vmatmul.f32.gmra.mxu0 %v1114
    %v1133 = vpop.f32.mrf.mxu0
    %v1134 = vadd.f32 0.0, %v1133
    %1135 = vdwg.mxu0
    %v1136 = vadd.f32 %v841, %v1134
    %v1138 = vsel %vm157, %v970, 0
    %v1141 = vsel %vm157, %v1003, 0
    %1143 = vmatpush.xpose.msra.mxu0 0.0
    %1144 = vmatpush.xpose.msra.mxu0 0.0
    %1145 = vmatpush.xpose.msra.mxu0 0.0
    %1146 = vmatpush.xpose.msra.mxu0 0.0
    %1147 = vmatpush.xpose.msra.mxu0 0.0
    %1148 = vmatpush.xpose.msra.mxu0 0.0
    %1149 = vmatpush.xpose.msra.mxu0 0.0
    %1150 = vmatpush.xpose.msra.mxu0 0.0
    %1151 = vmatpush.xpose.msra.mxu0 0.0
    %1152 = vmatpush.xpose.msra.mxu0 0.0
    %1153 = vmatpush.xpose.msra.mxu0 0.0
    %1154 = vmatpush.xpose.msra.mxu0 0.0
    %1155 = vmatpush.xpose.msra.mxu0 0.0
    %1156 = vmatpush.xpose.msra.mxu0 0.0
    %1157 = vmatpush.xpose.msra.mxu0 0.0
    %1158 = vmatpush.xpose.msra.mxu0 %v1141
    %1159 = vmatmul.f32.gmra.mxu0 %v1138
    %v1160 = vpop.f32.mrf.mxu0
    %v1161 = vadd.f32 0.0, %v1160
    %1162 = vdwg.mxu0
    %v1163 = vsel %vm157, %v1161, -inf
    %1164 = vmax.xlane.f32.xlu0 %v1163
    %v1165 = vpop.xlane.xlu0 %1164
    %v1166 = vsub.f32 %v1161, %v1165
    %v1167 = vmul.f32 %v1166, 1.442695
    %v1168 = vpow.pop %v1167
    %v1169 = vsel %vm157, %v1168, 0.0
    %1170 = vadd.xlane.f32.xlu0 %v1169
    %v1171 = vpop.xlane.xlu0 %1170
    %v1172 = vrcp.pop %v1171
    %v1173 = vmul.f32 %v1171, %v1172
    %v1174 = vsub.f32 1.0, %v1173
    %v1175 = vmul.f32 %v1172, %v1174
    %v1176 = vadd.f32 %v1172, %v1175
    %vm1177 = vweird.f32 %v1171
    %vm1178 = vweird.f32 %v1172
    %vm1179 = vmor %vm1177, %vm1178
    %v1180 = vsel %vm1179, %v1172, %v1176
    %v1181 = vand.u32 2147483647, %v1171
    %vm1182 = vcmp.eq.f32.partialorder %v1181, 8.507059e+37
    %v1183 = vand.u32 %v1171, 2147483648
    %v1184 = vor.u32 1.1754944e-38, %v1183
    %v1185 = vsel %vm1182, %v1184, %v1180
    %v1186 = vmul.f32 %v1168, %v1185
    %v1188 = vsel %vm157, %v1186, 0
    %1190 = vmatpush.msra.mxu0 0.0
    %1191 = vmatpush.msra.mxu0 0.0
    %1192 = vmatpush.msra.mxu0 0.0
    %1193 = vmatpush.msra.mxu0 0.0
    %1194 = vmatpush.msra.mxu0 0.0
    %1195 = vmatpush.msra.mxu0 0.0
    %1196 = vmatpush.msra.mxu0 0.0
    %1197 = vmatpush.msra.mxu0 0.0
    %1198 = vmatpush.msra.mxu0 0.0
    %1199 = vmatpush.msra.mxu0 0.0
    %1200 = vmatpush.msra.mxu0 0.0
    %1201 = vmatpush.msra.mxu0 0.0
    %1202 = vmatpush.msra.mxu0 0.0
    %1203 = vmatpush.msra.mxu0 0.0
    %1204 = vmatpush.msra.mxu0 0.0
    %1205 = vmatpush.msra.mxu0 %v1036
    %1206 = vmatmul.f32.gmra.mxu0 %v1188
    %v1207 = vpop.f32.mrf.mxu0
    %v1208 = vadd.f32 0.0, %v1207
    %1209 = vdwg.mxu0
    %v1211 = vsel %vm157, %v1208, 0
    %1213 = vmatpush.msra.mxu0 0.0
    %1214 = vmatpush.msra.mxu0 0.0
    %1215 = vmatpush.msra.mxu0 0.0
    %1216 = vmatpush.msra.mxu0 0.0
    %1217 = vmatpush.msra.mxu0 0.0
    %1218 = vmatpush.msra.mxu0 0.0
    %1219 = vmatpush.msra.mxu0 0.0
    %1220 = vmatpush.msra.mxu0 0.0
    %1221 = vmatpush.msra.mxu0 0.0
    %1222 = vmatpush.msra.mxu0 0.0
    %1223 = vmatpush.msra.mxu0 0.0
    %1224 = vmatpush.msra.mxu0 0.0
    %1225 = vmatpush.msra.mxu0 0.0
    %1226 = vmatpush.msra.mxu0 0.0
    %1227 = vmatpush.msra.mxu0 0.0
    %1228 = vmatpush.msra.mxu0 %v1112
    %1229 = vmatmul.f32.gmra.mxu0 %v1211
    %v1230 = vpop.f32.mrf.mxu0
    %v1231 = vadd.f32 0.0, %v1230
    %1232 = vdwg.mxu0
    %v1233 = vadd.f32 %v938, %v1231
    %v1234 = vld [vmem:[%s10] sm:$0x1]
    %v1236 = vperm.slane %v1234, 0
    %v1238 = vadd.f32 %v1136, %v1236
    %1239 = vst.msk [vmem:[#allocation2] sm:$0xff] %vm53, %v1238
    %v1240 = vadd.f32 %v1233, %v1236
    %1241 = vst.msk [vmem:[#allocation2 + $0x8] sm:$0xff] %vm53, %v1240
    // Predicated region
    $region46: #{cross_attention.1} parent=1 // pred_check
      _
    $region47: #{cross_attention.1} parent=1 // pred_check_branch
      %1243 = sbr.rel (0) target = $region49
    $region48: #{cross_attention.1} parent=1 // pred_region
      %1245 = vsyncadd [#allocation3], 0
      %s1246 = sshll.u32 [#allocation2], 4
      %s1247 = int_to_ptr.vmem [resolvable:$true] %s1246
      %s1248 = sshll.u32 %s11, 4
      %s1249 = int_to_ptr.hbm [resolvable:$true] %s1248
      %1254 = dma.vmem_to_hbm [thread:$0]  %s1247, 256, %s1249, [#allocation3], 128, 128, 8
    $region49: #{cross_attention.1} parent=1 // pred_fallthru
      _
    // Predicated region
    $region50: #{cross_attention.1} parent=1 // pred_check
      _
    $region51: #{cross_attention.1} parent=1 // pred_check_branch
      %1256 = sbr.rel (0) target = $region53
    $region52: #{cross_attention.1} parent=1 // pred_region
      %1258 = dma.done [#allocation3], 256
    $region53: #{cross_attention.1} parent=1 // pred_fallthru
      _
    %1259 = vsyncpa [#allocation3], 1

</llo_original>
